<compile_context>
chip_gen: v7x
topology: tpu7x:2x2x1
jax: 0.10.0
libtpu: 0.0.40
codegen_flags: <defaults>
</compile_context>

<pallas_src>
import functools

import jax
import jax.numpy as jnp
from jax.experimental import pallas as pl
from jax.experimental.pallas import tpu as pltpu

_LANE = 128                     # lane-dense output width (full vreg lane dim)
_VMEM_LIMIT = 32 * 1024 * 1024  # safe scoped-VMEM budget on v5e/v6e/v7x


def _num_tensorcores():
    """Best-effort TC-per-chip count (v7x: 2, v5e/v6e: 1). Never raises."""
    try:
        kind = jax.devices()[0].device_kind.lower()
        if "v7" in kind:
            return 2
    except Exception:
        pass
    return 1


def _round_up(x, m):
    return ((x + m - 1) // m) * m


def _mlp_kernel(x_ref, w1_ref, b1_ref, w2_ref, b2_ref, o_ref):
    # x tile: [TB, D_in]; w1: [D_in, H1]; w2: [H1, OUT_PAD]; out: [TB, OUT_PAD]
    # Cast (if any) happens here, on-chip, not as a wrapper-side HBM pass.
    x = x_ref[...].astype(w1_ref.dtype)
    # fc1 + tanh (f32 accumulation on the MXU)
    h = jnp.dot(x, w1_ref[...], preferred_element_type=jnp.float32) + b1_ref[...]
    h = jnp.tanh(h)
    # fc2 + tanh + sigmoid (f32 accumulation; activations stay f32 — v5e has
    # no bf16 VPU/EUP path)
    y = jnp.dot(h.astype(w2_ref.dtype), w2_ref[...],
                preferred_element_type=jnp.float32) + b2_ref[...]
    y = jnp.tanh(y)
    o_ref[...] = jax.nn.sigmoid(y).astype(o_ref.dtype)


def prepare_params(w1, b1, w2, b2, *, compute_dtype=jnp.float32):
    """One-time layout work (NOT per-forward): transpose weights to [in, out]
    and pad the output dimension to a lane-dense 128 so the kernel stores are
    unmasked full-lane vst. Biases are kept in f32."""
    out_dim = w2.shape[0]
    hidden1 = w2.shape[1]

    w1_t = jnp.asarray(w1.T, dtype=compute_dtype)               # [D_in, H1]
    b1_2d = jnp.asarray(b1, dtype=jnp.float32).reshape(1, -1)   # [1, H1]

    out_pad = max(_LANE, _round_up(out_dim, _LANE))
    w2_t = jnp.zeros((hidden1, out_pad), dtype=compute_dtype)
    w2_t = w2_t.at[:, :out_dim].set(jnp.asarray(w2.T, dtype=compute_dtype))
    b2_2d = jnp.zeros((1, out_pad), dtype=jnp.float32)
    b2_2d = b2_2d.at[:, :out_dim].set(jnp.asarray(b2, dtype=jnp.float32))

    return w1_t, b1_2d, w2_t, b2_2d, out_dim


def shallow_ffnn_forward(x, w1_t, b1_2d, w2_t, b2_2d, out_dim, *,
                         out_dtype=jnp.float32):
    """x: [B, D_in] float32; params from prepare_params().
    out_dtype=jnp.bfloat16 halves the padded-output HBM write (useful on v5e)
    at the cost of ~1e-3 output precision."""
    B, d_in = x.shape
    h1 = w1_t.shape[1]
    out_pad = w2_t.shape[1]
    itemsize = jnp.dtype(w1_t.dtype).itemsize

    n_cores = _num_tensorcores()

    # Biggest legal batch tile under the VMEM budget: x and out tiles are the
    # only per-step pipelined buffers (double-buffered); weights are resident.
    weight_bytes = (w1_t.size + w2_t.size) * itemsize + (b1_2d.size + b2_2d.size) * 4
    bytes_per_row = (d_in * itemsize + out_pad * jnp.dtype(out_dtype).itemsize) * 2
    tb_cap = max(8, ((_VMEM_LIMIT // 2 - weight_bytes) // bytes_per_row) // 8 * 8)

    # Target: one tile per TensorCore (grid length == n_cores) when it fits;
    # on v5e/v6e that is a single grid step (no per-step overhead), on v7x it
    # is 2 parallel steps sharded across the 2 TCs.
    tb = min(tb_cap, _round_up(max(1, pl.cdiv(B, n_cores)), 8))
    n_steps = pl.cdiv(B, tb)
    if n_cores > 1:
        n_steps = _round_up(n_steps, n_cores)
    b_pad = n_steps * tb

    x_in = x
    if b_pad != B:
        x_in = jnp.pad(x, ((0, b_pad - B), (0, 0)))

    out = pl.pallas_call(
        _mlp_kernel,
        out_shape=jax.ShapeDtypeStruct((b_pad, out_pad), out_dtype),
        grid=(n_steps,),
        in_specs=[
            # x: tiled along batch, pipelined by Pallas.
            pl.BlockSpec((tb, d_in), lambda i: (i, 0)),
            # Weights/biases: constant index_map -> fetched once, VMEM-resident
            # across grid iterations (default buffering; nothing to pipeline).
            pl.BlockSpec((d_in, h1), lambda i: (0, 0)),
            pl.BlockSpec((1, h1), lambda i: (0, 0)),
            pl.BlockSpec((h1, out_pad), lambda i: (0, 0)),
            pl.BlockSpec((1, out_pad), lambda i: (0, 0)),
        ],
        out_specs=pl.BlockSpec((tb, out_pad), lambda i: (i, 0)),
        compiler_params=pltpu.CompilerParams(
            # Batch axis is embarrassingly parallel -> shard over TCs on v7x.
            dimension_semantics=("parallel",),
            vmem_limit_bytes=_VMEM_LIMIT,
        ),
    )(x_in, w1_t, b1_2d, w2_t, b2_2d)

    # Drop batch padding and the lane padding of the output dimension.
    # (Downstream consumers that can read the padded [B, 128] slab directly
    #  may skip this slice to save one HBM pass.)
    return out[:B, :out_dim]


def _reference(x, w1, b1, w2, b2):
    h = jnp.tanh(x @ w1.T + b1)
    y = jnp.tanh(h @ w2.T + b2)
    return jax.nn.sigmoid(y)


if __name__ == "__main__":
    # Shapes consistent with the module's forward pass:
    # input_dim=16, hidden_dim1=32, output_dim=8 (hidden_dim2/3 are unused by
    # the PyTorch forward). Batch=512 so the batch tiling/parallel grid is
    # exercised (1 step on v5e/v6e, 2 parallel steps on v7x).
    batch, input_dim, hidden_dim1, output_dim = 512, 16, 32, 8

    key = jax.random.PRNGKey(0)
    kx, kw1, kb1, kw2, kb2 = jax.random.split(key, 5)

    x = jax.random.normal(kx, (batch, input_dim), dtype=jnp.float32)
    w1 = jax.random.normal(kw1, (hidden_dim1, input_dim), dtype=jnp.float32) * 0.1
    b1 = jax.random.normal(kb1, (hidden_dim1,), dtype=jnp.float32) * 0.1
    w2 = jax.random.normal(kw2, (output_dim, hidden_dim1), dtype=jnp.float32) * 0.1
    b2 = jax.random.normal(kb2, (output_dim,), dtype=jnp.float32) * 0.1

    # One-time layout prep (transpose + lane-dense output padding), then a
    # jitted forward so the pad/slice glue fuses with the pallas_call.
    w1_t, b1_2d, w2_t, b2_2d, out_dim = prepare_params(w1, b1, w2, b2)

    fwd = jax.jit(functools.partial(shallow_ffnn_forward, out_dim=out_dim))
    out = jax.block_until_ready(fwd(x, w1_t, b1_2d, w2_t, b2_2d))

    ref = _reference(x, w1, b1, w2, b2)
    assert out.shape == (batch, output_dim)
    assert jnp.allclose(out, ref, atol=1e-5, rtol=1e-5), "mismatch vs reference"

    print("KERNEL_OK")
</pallas_src>

<mosaic_0001>
module attributes {stable_mosaic.version = 11 : i64} {
  func.func @_mlp_kernel(%arg0: i32, %arg1: memref<512x16xf32, #tpu.memory_space<vmem>>, %arg2: memref<16x32xf32, #tpu.memory_space<vmem>>, %arg3: memref<1x32xf32, #tpu.memory_space<vmem>>, %arg4: memref<32x128xf32, #tpu.memory_space<vmem>>, %arg5: memref<1x128xf32, #tpu.memory_space<vmem>>, %arg6: memref<512x128xf32, #tpu.memory_space<vmem>>) attributes {dimension_semantics = [#tpu.dimension_semantics<parallel>], iteration_bounds = array<i64: 1>, scalar_prefetch = 0 : i64, scratch_operands = 0 : i64, tpu.core_type = #tpu.core_type<tc>, window_params = [{transform_indices = @transform_0, window_bounds = array<i64: 512, 16>}, {pipeline_mode = #tpu.pipeline_mode<synchronous>, transform_indices = @transform_1, window_bounds = array<i64: 16, 32>}, {pipeline_mode = #tpu.pipeline_mode<synchronous>, transform_indices = @transform_2, window_bounds = array<i64: 1, 32>}, {pipeline_mode = #tpu.pipeline_mode<synchronous>, transform_indices = @transform_3, window_bounds = array<i64: 32, 128>}, {pipeline_mode = #tpu.pipeline_mode<synchronous>, transform_indices = @transform_4, window_bounds = array<i64: 1, 128>}, {transform_indices = @transform_5, window_bounds = array<i64: 512, 128>}]} {
    %c0 = arith.constant 0 : index
    %c0_0 = arith.constant 0 : index
    %0 = vector.load %arg1[%c0, %c0_0] : memref<512x16xf32, #tpu.memory_space<vmem>>, vector<512x16xf32>
    %c0_1 = arith.constant 0 : index
    %c0_2 = arith.constant 0 : index
    %1 = vector.load %arg2[%c0_1, %c0_2] : memref<16x32xf32, #tpu.memory_space<vmem>>, vector<16x32xf32>
    %cst = arith.constant dense<0.000000e+00> : vector<512x32xf32>
    %2 = tpu.matmul %0, %1, %cst {dimension_numbers = #tpu.dot_dimension_numbers<[1], [0], [0], [1], [0, 0, 1, 1], [], []>} : vector<512x16xf32>, vector<16x32xf32>, vector<512x32xf32> -> vector<512x32xf32>
    %c0_3 = arith.constant 0 : index
    %c0_4 = arith.constant 0 : index
    %3 = vector.load %arg3[%c0_3, %c0_4] : memref<1x32xf32, #tpu.memory_space<vmem>>, vector<1x32xf32>
    %4 = vector.broadcast %3 : vector<1x32xf32> to vector<512x32xf32>
    %5 = arith.addf %2, %4 : vector<512x32xf32>
    %6 = math.tanh %5 : vector<512x32xf32>
    %c0_5 = arith.constant 0 : index
    %c0_6 = arith.constant 0 : index
    %7 = vector.load %arg4[%c0_5, %c0_6] : memref<32x128xf32, #tpu.memory_space<vmem>>, vector<32x128xf32>
    %cst_7 = arith.constant dense<0.000000e+00> : vector<512x128xf32>
    %8 = tpu.matmul %6, %7, %cst_7 {dimension_numbers = #tpu.dot_dimension_numbers<[1], [0], [0], [1], [0, 0, 1, 1], [], []>} : vector<512x32xf32>, vector<32x128xf32>, vector<512x128xf32> -> vector<512x128xf32>
    %c0_8 = arith.constant 0 : index
    %c0_9 = arith.constant 0 : index
    %9 = vector.load %arg5[%c0_8, %c0_9] : memref<1x128xf32, #tpu.memory_space<vmem>>, vector<1x128xf32>
    %10 = vector.broadcast %9 : vector<1x128xf32> to vector<512x128xf32>
    %11 = arith.addf %8, %10 : vector<512x128xf32>
    %12 = math.tanh %11 : vector<512x128xf32>
    %13 = arith.negf %12 : vector<512x128xf32>
    %14 = math.exp %13 : vector<512x128xf32>
    %cst_10 = arith.constant 1.000000e+00 : f32
    %15 = vector.broadcast %cst_10 : f32 to vector<512x128xf32>
    %16 = arith.addf %15, %14 : vector<512x128xf32>
    %17 = arith.divf %15, %16 : vector<512x128xf32>
    %c0_11 = arith.constant 0 : index
    %c0_12 = arith.constant 0 : index
    %18 = vector.load %arg6[%c0_11, %c0_12] : memref<512x128xf32, #tpu.memory_space<vmem>>, vector<512x128xf32>
    tpu.vector_store %arg6[%c0_11, %c0_12], %17 {strides = array<i32>} : memref<512x128xf32, #tpu.memory_space<vmem>>, vector<512x128xf32>,
    return
  }
  func.func @transform_0(%arg0: i32) -> (i32, i32) {
    %c0_i32 = arith.constant 0 : i32
    %c0_i32_0 = arith.constant 0 : i32
    return %arg0, %c0_i32 : i32, i32
  }
  func.func @transform_1(%arg0: i32) -> (i32, i32) {
    %c0_i32 = arith.constant 0 : i32
    %c0_i32_0 = arith.constant 0 : i32
    %c0_i32_1 = arith.constant 0 : i32
    return %c0_i32, %c0_i32_0 : i32, i32
  }
  func.func @transform_2(%arg0: i32) -> (i32, i32) {
    %c0_i32 = arith.constant 0 : i32
    %c0_i32_0 = arith.constant 0 : i32
    %c0_i32_1 = arith.constant 0 : i32
    return %c0_i32, %c0_i32_0 : i32, i32
  }
  func.func @transform_3(%arg0: i32) -> (i32, i32) {
    %c0_i32 = arith.constant 0 : i32
    %c0_i32_0 = arith.constant 0 : i32
    %c0_i32_1 = arith.constant 0 : i32
    return %c0_i32, %c0_i32_0 : i32, i32
  }
  func.func @transform_4(%arg0: i32) -> (i32, i32) {
    %c0_i32 = arith.constant 0 : i32
    %c0_i32_0 = arith.constant 0 : i32
    %c0_i32_1 = arith.constant 0 : i32
    return %c0_i32, %c0_i32_0 : i32, i32
  }
  func.func @transform_5(%arg0: i32) -> (i32, i32) {
    %c0_i32 = arith.constant 0 : i32
    %c0_i32_0 = arith.constant 0 : i32
    return %arg0, %c0_i32 : i32, i32
  }
}

</mosaic_0001>

<llo_original>
// kernel: shallow_ffnn_forward.1
$region0: #{shallow_ffnn_forward.1}
  #allocation0 [shape = 'u32[]', space=smem, size = 0x4, offset = 0x4, fixed_abs, tag = 'smem constant byte address 0x4 - core index']
  #allocation1 [shape = 'u32[144,128]{1,0:T(1,128)}', space=vmem, size = 0x12000, scoped, tag = 'internal scratch']
  %s0 = inlined_call_operand.vmem [shape: f32[512,16], index: 0, kind: input, shape index: {}]
  %s1 = inlined_call_operand.vmem [shape: f32[16,32], index: 1, kind: input, shape index: {}]
  %s2 = inlined_call_operand.vmem [shape: f32[1,32], index: 2, kind: input, shape index: {}]
  %s3 = inlined_call_operand.vmem [shape: f32[32,128], index: 3, kind: input, shape index: {}]
  %s4 = inlined_call_operand.vmem [shape: f32[1,128], index: 4, kind: input, shape index: {}]
  %s5 = inlined_call_operand.vmem [shape: f32[512,128], index: 5, kind: output, shape index: {}]
  %s6 = sld [smem:[#allocation0]]
  $region30: #{shallow_ffnn_forward.1} parent=0
    _
  %s8 = ssub.s32 1, %s6
  %s9 = scalar_select 0, %s8, %s6
  // Predicated region
  $region2: #{shallow_ffnn_forward.1} parent=0 // pred_check
    _
  $region3: #{shallow_ffnn_forward.1} parent=0 // pred_check_branch
    %11 = sbr.rel (0) target = $region5
  $region4: #{shallow_ffnn_forward.1} parent=0 // pred_region
    _
  $region5: #{shallow_ffnn_forward.1} parent=0 // pred_fallthru
    _
  // Predicated region
  $region6: #{shallow_ffnn_forward.1} parent=0 // pred_check
    _
  $region7: #{shallow_ffnn_forward.1} parent=0 // pred_check_branch
    %13 = sbr.rel (0) target = $region9
  $region8: #{shallow_ffnn_forward.1} parent=0 // pred_region
    _
  $region9: #{shallow_ffnn_forward.1} parent=0 // pred_fallthru
    _
  // Predicated region
  $region10: #{shallow_ffnn_forward.1} parent=0 // pred_check
    _
  $region11: #{shallow_ffnn_forward.1} parent=0 // pred_check_branch
    %15 = sbr.rel (0) target = $region13
  $region12: #{shallow_ffnn_forward.1} parent=0 // pred_region
    _
  $region13: #{shallow_ffnn_forward.1} parent=0 // pred_fallthru
    _
  // Predicated region
  $region14: #{shallow_ffnn_forward.1} parent=0 // pred_check
    _
  $region15: #{shallow_ffnn_forward.1} parent=0 // pred_check_branch
    %17 = sbr.rel (0) target = $region17
  $region16: #{shallow_ffnn_forward.1} parent=0 // pred_region
    _
  $region17: #{shallow_ffnn_forward.1} parent=0 // pred_fallthru
    _
  // Predicated region
  $region18: #{shallow_ffnn_forward.1} parent=0 // pred_check
    _
  $region19: #{shallow_ffnn_forward.1} parent=0 // pred_check_branch
    %19 = sbr.rel (0) target = $region21
  $region20: #{shallow_ffnn_forward.1} parent=0 // pred_region
    _
  $region21: #{shallow_ffnn_forward.1} parent=0 // pred_fallthru
    _
  %v20 = vld [vmem:[%s0] sm:$0xff]
  %v21 = vld [vmem:[%s0 + $0x8] sm:$0xff]
  %v22 = vld [vmem:[%s0 + $0x10] sm:$0xff]
  %v23 = vld [vmem:[%s0 + $0x18] sm:$0xff]
  %v24 = vld [vmem:[%s0 + $0x20] sm:$0xff]
  %v25 = vld [vmem:[%s0 + $0x28] sm:$0xff]
  %v26 = vld [vmem:[%s0 + $0x30] sm:$0xff]
  %v27 = vld [vmem:[%s0 + $0x38] sm:$0xff]
  %v28 = vld [vmem:[%s0 + $0x40] sm:$0xff]
  %v29 = vld [vmem:[%s0 + $0x48] sm:$0xff]
  %v30 = vld [vmem:[%s0 + $0x50] sm:$0xff]
  %v31 = vld [vmem:[%s0 + $0x58] sm:$0xff]
  %v32 = vld [vmem:[%s0 + $0x60] sm:$0xff]
  %v33 = vld [vmem:[%s0 + $0x68] sm:$0xff]
  %v34 = vld [vmem:[%s0 + $0x70] sm:$0xff]
  %v35 = vld [vmem:[%s0 + $0x78] sm:$0xff]
  %v36 = vld [vmem:[%s0 + $0x80] sm:$0xff]
  %v37 = vld [vmem:[%s0 + $0x88] sm:$0xff]
  %v38 = vld [vmem:[%s0 + $0x90] sm:$0xff]
  %v39 = vld [vmem:[%s0 + $0x98] sm:$0xff]
  %v40 = vld [vmem:[%s0 + $0xa0] sm:$0xff]
  %v41 = vld [vmem:[%s0 + $0xa8] sm:$0xff]
  %v42 = vld [vmem:[%s0 + $0xb0] sm:$0xff]
  %v43 = vld [vmem:[%s0 + $0xb8] sm:$0xff]
  %v44 = vld [vmem:[%s0 + $0xc0] sm:$0xff]
  %v45 = vld [vmem:[%s0 + $0xc8] sm:$0xff]
  %v46 = vld [vmem:[%s0 + $0xd0] sm:$0xff]
  %v47 = vld [vmem:[%s0 + $0xd8] sm:$0xff]
  %v48 = vld [vmem:[%s0 + $0xe0] sm:$0xff]
  %v49 = vld [vmem:[%s0 + $0xe8] sm:$0xff]
  %v50 = vld [vmem:[%s0 + $0xf0] sm:$0xff]
  %v51 = vld [vmem:[%s0 + $0xf8] sm:$0xff]
  %v52 = vld [vmem:[%s0 + $0x100] sm:$0xff]
  %v53 = vld [vmem:[%s0 + $0x108] sm:$0xff]
  %v54 = vld [vmem:[%s0 + $0x110] sm:$0xff]
  %v55 = vld [vmem:[%s0 + $0x118] sm:$0xff]
  %v56 = vld [vmem:[%s0 + $0x120] sm:$0xff]
  %v57 = vld [vmem:[%s0 + $0x128] sm:$0xff]
  %v58 = vld [vmem:[%s0 + $0x130] sm:$0xff]
  %v59 = vld [vmem:[%s0 + $0x138] sm:$0xff]
  %v60 = vld [vmem:[%s0 + $0x140] sm:$0xff]
  %v61 = vld [vmem:[%s0 + $0x148] sm:$0xff]
  %v62 = vld [vmem:[%s0 + $0x150] sm:$0xff]
  %v63 = vld [vmem:[%s0 + $0x158] sm:$0xff]
  %v64 = vld [vmem:[%s0 + $0x160] sm:$0xff]
  %v65 = vld [vmem:[%s0 + $0x168] sm:$0xff]
  %v66 = vld [vmem:[%s0 + $0x170] sm:$0xff]
  %v67 = vld [vmem:[%s0 + $0x178] sm:$0xff]
  %v68 = vld [vmem:[%s0 + $0x180] sm:$0xff]
  %v69 = vld [vmem:[%s0 + $0x188] sm:$0xff]
  %v70 = vld [vmem:[%s0 + $0x190] sm:$0xff]
  %v71 = vld [vmem:[%s0 + $0x198] sm:$0xff]
  %v72 = vld [vmem:[%s0 + $0x1a0] sm:$0xff]
  %v73 = vld [vmem:[%s0 + $0x1a8] sm:$0xff]
  %v74 = vld [vmem:[%s0 + $0x1b0] sm:$0xff]
  %v75 = vld [vmem:[%s0 + $0x1b8] sm:$0xff]
  %v76 = vld [vmem:[%s0 + $0x1c0] sm:$0xff]
  %v77 = vld [vmem:[%s0 + $0x1c8] sm:$0xff]
  %v78 = vld [vmem:[%s0 + $0x1d0] sm:$0xff]
  %v79 = vld [vmem:[%s0 + $0x1d8] sm:$0xff]
  %v80 = vld [vmem:[%s0 + $0x1e0] sm:$0xff]
  %v81 = vld [vmem:[%s0 + $0x1e8] sm:$0xff]
  %v82 = vld [vmem:[%s0 + $0x1f0] sm:$0xff]
  %v83 = vld [vmem:[%s0 + $0x1f8] sm:$0xff]
  %v84 = vld [vmem:[%s1] sm:$0xff]
  %v85 = vld [vmem:[%s1 + $0x8] sm:$0xff]
  %v86 = vld [vmem:[%s2] sm:$0x1]
  %v88 = vlaneseq
  %v89 = vshrl.u32 %v88, 7
  %v90 = vsub.s32 0, %v89
  %v91 = vrot.slane %v86, %v90
  %vm93 = vcmask 130048
  %v95 = vsel %vm93, %v20, 0
  %v98 = vsel %vm93, %v21, 0
  %v101 = vsel %vm93, %v22, 0
  %v104 = vsel %vm93, %v23, 0
  %v107 = vsel %vm93, %v24, 0
  %v110 = vsel %vm93, %v25, 0
  %v113 = vsel %vm93, %v26, 0
  %v116 = vsel %vm93, %v27, 0
  %v119 = vsel %vm93, %v28, 0
  %v122 = vsel %vm93, %v29, 0
  %v125 = vsel %vm93, %v30, 0
  %v128 = vsel %vm93, %v31, 0
  %v131 = vsel %vm93, %v32, 0
  %v134 = vsel %vm93, %v33, 0
  %v137 = vsel %vm93, %v34, 0
  %v140 = vsel %vm93, %v35, 0
  %v143 = vsel %vm93, %v36, 0
  %v146 = vsel %vm93, %v37, 0
  %v149 = vsel %vm93, %v38, 0
  %v152 = vsel %vm93, %v39, 0
  %v155 = vsel %vm93, %v40, 0
  %v158 = vsel %vm93, %v41, 0
  %v161 = vsel %vm93, %v42, 0
  %v164 = vsel %vm93, %v43, 0
  %v167 = vsel %vm93, %v44, 0
  %v170 = vsel %vm93, %v45, 0
  %v173 = vsel %vm93, %v46, 0
  %v176 = vsel %vm93, %v47, 0
  %v179 = vsel %vm93, %v48, 0
  %v182 = vsel %vm93, %v49, 0
  %v185 = vsel %vm93, %v50, 0
  %v188 = vsel %vm93, %v51, 0
  %v191 = vsel %vm93, %v52, 0
  %v194 = vsel %vm93, %v53, 0
  %v197 = vsel %vm93, %v54, 0
  %v200 = vsel %vm93, %v55, 0
  %v203 = vsel %vm93, %v56, 0
  %v206 = vsel %vm93, %v57, 0
  %v209 = vsel %vm93, %v58, 0
  %v212 = vsel %vm93, %v59, 0
  %v215 = vsel %vm93, %v60, 0
  %v218 = vsel %vm93, %v61, 0
  %v221 = vsel %vm93, %v62, 0
  %v224 = vsel %vm93, %v63, 0
  %v227 = vsel %vm93, %v64, 0
  %v230 = vsel %vm93, %v65, 0
  %v233 = vsel %vm93, %v66, 0
  %v236 = vsel %vm93, %v67, 0
  %v239 = vsel %vm93, %v68, 0
  %v242 = vsel %vm93, %v69, 0
  %v245 = vsel %vm93, %v70, 0
  %v248 = vsel %vm93, %v71, 0
  %v251 = vsel %vm93, %v72, 0
  %v254 = vsel %vm93, %v73, 0
  %v257 = vsel %vm93, %v74, 0
  %v260 = vsel %vm93, %v75, 0
  %v263 = vsel %vm93, %v76, 0
  %v266 = vsel %vm93, %v77, 0
  %v269 = vsel %vm93, %v78, 0
  %v272 = vsel %vm93, %v79, 0
  %v275 = vsel %vm93, %v80, 0
  %v278 = vsel %vm93, %v81, 0
  %v281 = vsel %vm93, %v82, 0
  %v284 = vsel %vm93, %v83, 0
  %286 = vmatprep.subr.mxu0 0.0
  %287 = vmatpush1.msra.mxu0 %v84
  %288 = vmatprep.subr.mxu0 0.0
  %289 = vmatpush1.msra.mxu0 %v85
  %290 = vmatprep.subr.mxu0 0.0
  %291 = vmatpush1.msra.mxu0 0.0
  %292 = vmatprep.subr.mxu0 0.0
  %293 = vmatpush1.msra.mxu0 0.0
  %294 = vmatprep.subr.mxu0 0.0
  %295 = vmatpush1.msra.mxu0 0.0
  %296 = vmatprep.subr.mxu0 0.0
  %297 = vmatpush1.msra.mxu0 0.0
  %298 = vmatprep.subr.mxu0 0.0
  %299 = vmatpush1.msra.mxu0 0.0
  %300 = vmatprep.subr.mxu0 0.0
  %301 = vmatpush1.msra.mxu0 0.0
  %302 = vmatprep.subr.mxu0 0.0
  %303 = vmatpush1.msra.mxu0 0.0
  %304 = vmatprep.subr.mxu0 0.0
  %305 = vmatpush1.msra.mxu0 0.0
  %306 = vmatprep.subr.mxu0 0.0
  %307 = vmatpush1.msra.mxu0 0.0
  %308 = vmatprep.subr.mxu0 0.0
  %309 = vmatpush1.msra.mxu0 0.0
  %310 = vmatprep.subr.mxu0 0.0
  %311 = vmatpush1.msra.mxu0 0.0
  %312 = vmatprep.subr.mxu0 0.0
  %313 = vmatpush1.msra.mxu0 0.0
  %314 = vmatprep.subr.mxu0 0.0
  %315 = vmatpush1.msra.mxu0 0.0
  %316 = vmatprep.subr.mxu0 0.0
  %317 = vmatpush1.msra.mxu0 0.0
  %318 = vmatprep.subr.mxu0 0.0
  %319 = vmatpush1.msra.mxu0 0.0
  %320 = vmatprep.subr.mxu0 0.0
  %321 = vmatpush1.msra.mxu0 0.0
  %322 = vmatprep.subr.mxu0 0.0
  %323 = vmatpush1.msra.mxu0 0.0
  %324 = vmatprep.subr.mxu0 0.0
  %325 = vmatpush1.msra.mxu0 0.0
  %326 = vmatprep.subr.mxu0 0.0
  %327 = vmatpush1.msra.mxu0 0.0
  %328 = vmatprep.subr.mxu0 0.0
  %329 = vmatpush1.msra.mxu0 0.0
  %330 = vmatprep.subr.mxu0 0.0
  %331 = vmatpush1.msra.mxu0 0.0
  %332 = vmatprep.subr.mxu0 0.0
  %333 = vmatpush1.msra.mxu0 0.0
  %334 = vmatprep.subr.mxu0 0.0
  %335 = vmatpush1.msra.mxu0 0.0
  %336 = vmatprep.subr.mxu0 0.0
  %337 = vmatpush1.msra.mxu0 0.0
  %338 = vmatprep.subr.mxu0 0.0
  %339 = vmatpush1.msra.mxu0 0.0
  %340 = vmatprep.subr.mxu0 0.0
  %341 = vmatpush1.msra.mxu0 0.0
  %342 = vmatprep.subr.mxu0 0.0
  %343 = vmatpush1.msra.mxu0 0.0
  %344 = vmatprep.subr.mxu0 0.0
  %345 = vmatpush1.msra.mxu0 0.0
  %346 = vmatprep.subr.mxu0 0.0
  %347 = vmatpush1.msra.mxu0 0.0
  %348 = vmatprep.subr.mxu0 0.0
  %349 = vmatpush1.msra.mxu0 0.0
  %350 = vmatprep.mubr.f32.mxu0 0.0
  %351 = vmatmul.mubr.f32.gmra.mrb[0].mxu0 %v95
  %v352 = vpop.f32.mrb[0].mxu0
  %v353 = vadd.f32 %v91, %v352
  %v354 = vpop.f32.mrb[0].mxu0
  %355 = vmatprep.mubr.f32.mxu0 0.0
  %356 = vmatmul.mubr.f32.gmra.mrb[0].mxu0 %v98
  %v357 = vpop.f32.mrb[0].mxu0
  %v358 = vadd.f32 %v91, %v357
  %v359 = vpop.f32.mrb[0].mxu0
  %360 = vmatprep.mubr.f32.mxu0 0.0
  %361 = vmatmul.mubr.f32.gmra.mrb[0].mxu0 %v101
  %v362 = vpop.f32.mrb[0].mxu0
  %v363 = vadd.f32 %v91, %v362
  %v364 = vpop.f32.mrb[0].mxu0
  %365 = vmatprep.mubr.f32.mxu0 0.0
  %366 = vmatmul.mubr.f32.gmra.mrb[0].mxu0 %v104
  %v367 = vpop.f32.mrb[0].mxu0
  %v368 = vadd.f32 %v91, %v367
  %v369 = vpop.f32.mrb[0].mxu0
  %370 = vmatprep.mubr.f32.mxu0 0.0
  %371 = vmatmul.mubr.f32.gmra.mrb[0].mxu0 %v107
  %v372 = vpop.f32.mrb[0].mxu0
  %v373 = vadd.f32 %v91, %v372
  %v374 = vpop.f32.mrb[0].mxu0
  %375 = vmatprep.mubr.f32.mxu0 0.0
  %376 = vmatmul.mubr.f32.gmra.mrb[0].mxu0 %v110
  %v377 = vpop.f32.mrb[0].mxu0
  %v378 = vadd.f32 %v91, %v377
  %v379 = vpop.f32.mrb[0].mxu0
  %380 = vmatprep.mubr.f32.mxu0 0.0
  %381 = vmatmul.mubr.f32.gmra.mrb[0].mxu0 %v113
  %v382 = vpop.f32.mrb[0].mxu0
  %v383 = vadd.f32 %v91, %v382
  %v384 = vpop.f32.mrb[0].mxu0
  %385 = vmatprep.mubr.f32.mxu0 0.0
  %386 = vmatmul.mubr.f32.gmra.mrb[0].mxu0 %v116
  %v387 = vpop.f32.mrb[0].mxu0
  %v388 = vadd.f32 %v91, %v387
  %v389 = vpop.f32.mrb[0].mxu0
  %390 = vmatprep.mubr.f32.mxu0 0.0
  %391 = vmatmul.mubr.f32.gmra.mrb[0].mxu0 %v119
  %v392 = vpop.f32.mrb[0].mxu0
  %v393 = vadd.f32 %v91, %v392
  %v394 = vpop.f32.mrb[0].mxu0
  %395 = vmatprep.mubr.f32.mxu0 0.0
  %396 = vmatmul.mubr.f32.gmra.mrb[0].mxu0 %v122
  %v397 = vpop.f32.mrb[0].mxu0
  %v398 = vadd.f32 %v91, %v397
  %v399 = vpop.f32.mrb[0].mxu0
  %400 = vmatprep.mubr.f32.mxu0 0.0
  %401 = vmatmul.mubr.f32.gmra.mrb[0].mxu0 %v125
  %v402 = vpop.f32.mrb[0].mxu0
  %v403 = vadd.f32 %v91, %v402
  %v404 = vpop.f32.mrb[0].mxu0
  %405 = vmatprep.mubr.f32.mxu0 0.0
  %406 = vmatmul.mubr.f32.gmra.mrb[0].mxu0 %v128
  %v407 = vpop.f32.mrb[0].mxu0
  %v408 = vadd.f32 %v91, %v407
  %v409 = vpop.f32.mrb[0].mxu0
  %410 = vmatprep.mubr.f32.mxu0 0.0
  %411 = vmatmul.mubr.f32.gmra.mrb[0].mxu0 %v131
  %v412 = vpop.f32.mrb[0].mxu0
  %v413 = vadd.f32 %v91, %v412
  %v414 = vpop.f32.mrb[0].mxu0
  %415 = vmatprep.mubr.f32.mxu0 0.0
  %416 = vmatmul.mubr.f32.gmra.mrb[0].mxu0 %v134
  %v417 = vpop.f32.mrb[0].mxu0
  %v418 = vadd.f32 %v91, %v417
  %v419 = vpop.f32.mrb[0].mxu0
  %420 = vmatprep.mubr.f32.mxu0 0.0
  %421 = vmatmul.mubr.f32.gmra.mrb[0].mxu0 %v137
  %v422 = vpop.f32.mrb[0].mxu0
  %v423 = vadd.f32 %v91, %v422
  %v424 = vpop.f32.mrb[0].mxu0
  %425 = vmatprep.mubr.f32.mxu0 0.0
  %426 = vmatmul.mubr.f32.gmra.mrb[0].mxu0 %v140
  %v427 = vpop.f32.mrb[0].mxu0
  %v428 = vadd.f32 %v91, %v427
  %v429 = vpop.f32.mrb[0].mxu0
  %430 = vmatprep.mubr.f32.mxu0 0.0
  %431 = vmatmul.mubr.f32.gmra.mrb[0].mxu0 %v143
  %v432 = vpop.f32.mrb[0].mxu0
  %v433 = vadd.f32 %v91, %v432
  %v434 = vpop.f32.mrb[0].mxu0
  %435 = vmatprep.mubr.f32.mxu0 0.0
  %436 = vmatmul.mubr.f32.gmra.mrb[0].mxu0 %v146
  %v437 = vpop.f32.mrb[0].mxu0
  %v438 = vadd.f32 %v91, %v437
  %v439 = vpop.f32.mrb[0].mxu0
  %440 = vmatprep.mubr.f32.mxu0 0.0
  %441 = vmatmul.mubr.f32.gmra.mrb[0].mxu0 %v149
  %v442 = vpop.f32.mrb[0].mxu0
  %v443 = vadd.f32 %v91, %v442
  %v444 = vpop.f32.mrb[0].mxu0
  %445 = vmatprep.mubr.f32.mxu0 0.0
  %446 = vmatmul.mubr.f32.gmra.mrb[0].mxu0 %v152
  %v447 = vpop.f32.mrb[0].mxu0
  %v448 = vadd.f32 %v91, %v447
  %v449 = vpop.f32.mrb[0].mxu0
  %450 = vmatprep.mubr.f32.mxu0 0.0
  %451 = vmatmul.mubr.f32.gmra.mrb[0].mxu0 %v155
  %v452 = vpop.f32.mrb[0].mxu0
  %v453 = vadd.f32 %v91, %v452
  %v454 = vpop.f32.mrb[0].mxu0
  %455 = vmatprep.mubr.f32.mxu0 0.0
  %456 = vmatmul.mubr.f32.gmra.mrb[0].mxu0 %v158
  %v457 = vpop.f32.mrb[0].mxu0
  %v458 = vadd.f32 %v91, %v457
  %v459 = vpop.f32.mrb[0].mxu0
  %460 = vmatprep.mubr.f32.mxu0 0.0
  %461 = vmatmul.mubr.f32.gmra.mrb[0].mxu0 %v161
  %v462 = vpop.f32.mrb[0].mxu0
  %v463 = vadd.f32 %v91, %v462
  %v464 = vpop.f32.mrb[0].mxu0
  %465 = vmatprep.mubr.f32.mxu0 0.0
  %466 = vmatmul.mubr.f32.gmra.mrb[0].mxu0 %v164
  %v467 = vpop.f32.mrb[0].mxu0
  %v468 = vadd.f32 %v91, %v467
  %v469 = vpop.f32.mrb[0].mxu0
  %470 = vmatprep.mubr.f32.mxu0 0.0
  %471 = vmatmul.mubr.f32.gmra.mrb[0].mxu0 %v167
  %v472 = vpop.f32.mrb[0].mxu0
  %v473 = vadd.f32 %v91, %v472
  %v474 = vpop.f32.mrb[0].mxu0
  %475 = vmatprep.mubr.f32.mxu0 0.0
  %476 = vmatmul.mubr.f32.gmra.mrb[0].mxu0 %v170
  %v477 = vpop.f32.mrb[0].mxu0
  %v478 = vadd.f32 %v91, %v477
  %v479 = vpop.f32.mrb[0].mxu0
  %480 = vmatprep.mubr.f32.mxu0 0.0
  %481 = vmatmul.mubr.f32.gmra.mrb[0].mxu0 %v173
  %v482 = vpop.f32.mrb[0].mxu0
  %v483 = vadd.f32 %v91, %v482
  %v484 = vpop.f32.mrb[0].mxu0
  %485 = vmatprep.mubr.f32.mxu0 0.0
  %486 = vmatmul.mubr.f32.gmra.mrb[0].mxu0 %v176
  %v487 = vpop.f32.mrb[0].mxu0
  %v488 = vadd.f32 %v91, %v487
  %v489 = vpop.f32.mrb[0].mxu0
  %490 = vmatprep.mubr.f32.mxu0 0.0
  %491 = vmatmul.mubr.f32.gmra.mrb[0].mxu0 %v179
  %v492 = vpop.f32.mrb[0].mxu0
  %v493 = vadd.f32 %v91, %v492
  %v494 = vpop.f32.mrb[0].mxu0
  %495 = vmatprep.mubr.f32.mxu0 0.0
  %496 = vmatmul.mubr.f32.gmra.mrb[0].mxu0 %v182
  %v497 = vpop.f32.mrb[0].mxu0
  %v498 = vadd.f32 %v91, %v497
  %v499 = vpop.f32.mrb[0].mxu0
  %500 = vmatprep.mubr.f32.mxu0 0.0
  %501 = vmatmul.mubr.f32.gmra.mrb[0].mxu0 %v185
  %v502 = vpop.f32.mrb[0].mxu0
  %v503 = vadd.f32 %v91, %v502
  %v504 = vpop.f32.mrb[0].mxu0
  %505 = vmatprep.mubr.f32.mxu0 0.0
  %506 = vmatmul.mubr.f32.gmra.mrb[0].mxu0 %v188
  %v507 = vpop.f32.mrb[0].mxu0
  %v508 = vadd.f32 %v91, %v507
  %v509 = vpop.f32.mrb[0].mxu0
  %510 = vmatprep.mubr.f32.mxu0 0.0
  %511 = vmatmul.mubr.f32.gmra.mrb[0].mxu0 %v191
  %v512 = vpop.f32.mrb[0].mxu0
  %v513 = vadd.f32 %v91, %v512
  %v514 = vpop.f32.mrb[0].mxu0
  %515 = vmatprep.mubr.f32.mxu0 0.0
  %516 = vmatmul.mubr.f32.gmra.mrb[0].mxu0 %v194
  %v517 = vpop.f32.mrb[0].mxu0
  %v518 = vadd.f32 %v91, %v517
  %v519 = vpop.f32.mrb[0].mxu0
  %520 = vmatprep.mubr.f32.mxu0 0.0
  %521 = vmatmul.mubr.f32.gmra.mrb[0].mxu0 %v197
  %v522 = vpop.f32.mrb[0].mxu0
  %v523 = vadd.f32 %v91, %v522
  %v524 = vpop.f32.mrb[0].mxu0
  %525 = vmatprep.mubr.f32.mxu0 0.0
  %526 = vmatmul.mubr.f32.gmra.mrb[0].mxu0 %v200
  %v527 = vpop.f32.mrb[0].mxu0
  %v528 = vadd.f32 %v91, %v527
  %v529 = vpop.f32.mrb[0].mxu0
  %530 = vmatprep.mubr.f32.mxu0 0.0
  %531 = vmatmul.mubr.f32.gmra.mrb[0].mxu0 %v203
  %v532 = vpop.f32.mrb[0].mxu0
  %v533 = vadd.f32 %v91, %v532
  %v534 = vpop.f32.mrb[0].mxu0
  %535 = vmatprep.mubr.f32.mxu0 0.0
  %536 = vmatmul.mubr.f32.gmra.mrb[0].mxu0 %v206
  %v537 = vpop.f32.mrb[0].mxu0
  %v538 = vadd.f32 %v91, %v537
  %v539 = vpop.f32.mrb[0].mxu0
  %540 = vmatprep.mubr.f32.mxu0 0.0
  %541 = vmatmul.mubr.f32.gmra.mrb[0].mxu0 %v209
  %v542 = vpop.f32.mrb[0].mxu0
  %v543 = vadd.f32 %v91, %v542
  %v544 = vpop.f32.mrb[0].mxu0
  %545 = vmatprep.mubr.f32.mxu0 0.0
  %546 = vmatmul.mubr.f32.gmra.mrb[0].mxu0 %v212
  %v547 = vpop.f32.mrb[0].mxu0
  %v548 = vadd.f32 %v91, %v547
  %v549 = vpop.f32.mrb[0].mxu0
  %550 = vmatprep.mubr.f32.mxu0 0.0
  %551 = vmatmul.mubr.f32.gmra.mrb[0].mxu0 %v215
  %v552 = vpop.f32.mrb[0].mxu0
  %v553 = vadd.f32 %v91, %v552
  %v554 = vpop.f32.mrb[0].mxu0
  %555 = vmatprep.mubr.f32.mxu0 0.0
  %556 = vmatmul.mubr.f32.gmra.mrb[0].mxu0 %v218
  %v557 = vpop.f32.mrb[0].mxu0
  %v558 = vadd.f32 %v91, %v557
  %v559 = vpop.f32.mrb[0].mxu0
  %560 = vmatprep.mubr.f32.mxu0 0.0
  %561 = vmatmul.mubr.f32.gmra.mrb[0].mxu0 %v221
  %v562 = vpop.f32.mrb[0].mxu0
  %v563 = vadd.f32 %v91, %v562
  %v564 = vpop.f32.mrb[0].mxu0
  %565 = vmatprep.mubr.f32.mxu0 0.0
  %566 = vmatmul.mubr.f32.gmra.mrb[0].mxu0 %v224
  %v567 = vpop.f32.mrb[0].mxu0
  %v568 = vadd.f32 %v91, %v567
  %v569 = vpop.f32.mrb[0].mxu0
  %570 = vmatprep.mubr.f32.mxu0 0.0
  %571 = vmatmul.mubr.f32.gmra.mrb[0].mxu0 %v227
  %v572 = vpop.f32.mrb[0].mxu0
  %v573 = vadd.f32 %v91, %v572
  %v574 = vpop.f32.mrb[0].mxu0
  %575 = vmatprep.mubr.f32.mxu0 0.0
  %576 = vmatmul.mubr.f32.gmra.mrb[0].mxu0 %v230
  %v577 = vpop.f32.mrb[0].mxu0
  %v578 = vadd.f32 %v91, %v577
  %v579 = vpop.f32.mrb[0].mxu0
  %580 = vmatprep.mubr.f32.mxu0 0.0
  %581 = vmatmul.mubr.f32.gmra.mrb[0].mxu0 %v233
  %v582 = vpop.f32.mrb[0].mxu0
  %v583 = vadd.f32 %v91, %v582
  %v584 = vpop.f32.mrb[0].mxu0
  %585 = vmatprep.mubr.f32.mxu0 0.0
  %586 = vmatmul.mubr.f32.gmra.mrb[0].mxu0 %v236
  %v587 = vpop.f32.mrb[0].mxu0
  %v588 = vadd.f32 %v91, %v587
  %v589 = vpop.f32.mrb[0].mxu0
  %590 = vmatprep.mubr.f32.mxu0 0.0
  %591 = vmatmul.mubr.f32.gmra.mrb[0].mxu0 %v239
  %v592 = vpop.f32.mrb[0].mxu0
  %v593 = vadd.f32 %v91, %v592
  %v594 = vpop.f32.mrb[0].mxu0
  %595 = vmatprep.mubr.f32.mxu0 0.0
  %596 = vmatmul.mubr.f32.gmra.mrb[0].mxu0 %v242
  %v597 = vpop.f32.mrb[0].mxu0
  %v598 = vadd.f32 %v91, %v597
  %v599 = vpop.f32.mrb[0].mxu0
  %600 = vmatprep.mubr.f32.mxu0 0.0
  %601 = vmatmul.mubr.f32.gmra.mrb[0].mxu0 %v245
  %v602 = vpop.f32.mrb[0].mxu0
  %v603 = vadd.f32 %v91, %v602
  %v604 = vpop.f32.mrb[0].mxu0
  %605 = vmatprep.mubr.f32.mxu0 0.0
  %606 = vmatmul.mubr.f32.gmra.mrb[0].mxu0 %v248
  %v607 = vpop.f32.mrb[0].mxu0
  %v608 = vadd.f32 %v91, %v607
  %v609 = vpop.f32.mrb[0].mxu0
  %610 = vmatprep.mubr.f32.mxu0 0.0
  %611 = vmatmul.mubr.f32.gmra.mrb[0].mxu0 %v251
  %v612 = vpop.f32.mrb[0].mxu0
  %v613 = vadd.f32 %v91, %v612
  %v614 = vpop.f32.mrb[0].mxu0
  %615 = vmatprep.mubr.f32.mxu0 0.0
  %616 = vmatmul.mubr.f32.gmra.mrb[0].mxu0 %v254
  %v617 = vpop.f32.mrb[0].mxu0
  %v618 = vadd.f32 %v91, %v617
  %v619 = vpop.f32.mrb[0].mxu0
  %620 = vmatprep.mubr.f32.mxu0 0.0
  %621 = vmatmul.mubr.f32.gmra.mrb[0].mxu0 %v257
  %v622 = vpop.f32.mrb[0].mxu0
  %v623 = vadd.f32 %v91, %v622
  %v624 = vpop.f32.mrb[0].mxu0
  %625 = vmatprep.mubr.f32.mxu0 0.0
  %626 = vmatmul.mubr.f32.gmra.mrb[0].mxu0 %v260
  %v627 = vpop.f32.mrb[0].mxu0
  %v628 = vadd.f32 %v91, %v627
  %v629 = vpop.f32.mrb[0].mxu0
  %630 = vmatprep.mubr.f32.mxu0 0.0
  %631 = vmatmul.mubr.f32.gmra.mrb[0].mxu0 %v263
  %v632 = vpop.f32.mrb[0].mxu0
  %v633 = vadd.f32 %v91, %v632
  %v634 = vpop.f32.mrb[0].mxu0
  %635 = vmatprep.mubr.f32.mxu0 0.0
  %636 = vmatmul.mubr.f32.gmra.mrb[0].mxu0 %v266
  %v637 = vpop.f32.mrb[0].mxu0
  %v638 = vadd.f32 %v91, %v637
  %v639 = vpop.f32.mrb[0].mxu0
  %640 = vmatprep.mubr.f32.mxu0 0.0
  %641 = vmatmul.mubr.f32.gmra.mrb[0].mxu0 %v269
  %v642 = vpop.f32.mrb[0].mxu0
  %v643 = vadd.f32 %v91, %v642
  %v644 = vpop.f32.mrb[0].mxu0
  %645 = vmatprep.mubr.f32.mxu0 0.0
  %646 = vmatmul.mubr.f32.gmra.mrb[0].mxu0 %v272
  %v647 = vpop.f32.mrb[0].mxu0
  %v648 = vadd.f32 %v91, %v647
  %v649 = vpop.f32.mrb[0].mxu0
  %650 = vmatprep.mubr.f32.mxu0 0.0
  %651 = vmatmul.mubr.f32.gmra.mrb[0].mxu0 %v275
  %v652 = vpop.f32.mrb[0].mxu0
  %v653 = vadd.f32 %v91, %v652
  %v654 = vpop.f32.mrb[0].mxu0
  %655 = vmatprep.mubr.f32.mxu0 0.0
  %656 = vmatmul.mubr.f32.gmra.mrb[0].mxu0 %v278
  %v657 = vpop.f32.mrb[0].mxu0
  %v658 = vadd.f32 %v91, %v657
  %v659 = vpop.f32.mrb[0].mxu0
  %660 = vmatprep.mubr.f32.mxu0 0.0
  %661 = vmatmul.mubr.f32.gmra.mrb[0].mxu0 %v281
  %v662 = vpop.f32.mrb[0].mxu0
  %v663 = vadd.f32 %v91, %v662
  %v664 = vpop.f32.mrb[0].mxu0
  %665 = vmatprep.mubr.f32.mxu0 0.0
  %666 = vmatmul.mubr.f32.gmra.mrb[0].mxu0 %v284
  %v667 = vpop.f32.mrb[0].mxu0
  %v668 = vadd.f32 %v91, %v667
  %v669 = vpop.f32.mrb[0].mxu0
  %670 = vdwg.mxu0
  %v671 = vtanh.pop %v353
  %v672 = vtanh.pop %v358
  %v673 = vtanh.pop %v363
  %v674 = vtanh.pop %v368
  %v675 = vtanh.pop %v373
  %v676 = vtanh.pop %v378
  %v677 = vtanh.pop %v383
  %v678 = vtanh.pop %v388
  %v679 = vtanh.pop %v393
  %v680 = vtanh.pop %v398
  %v681 = vtanh.pop %v403
  %v682 = vtanh.pop %v408
  %v683 = vtanh.pop %v413
  %v684 = vtanh.pop %v418
  %v685 = vtanh.pop %v423
  %v686 = vtanh.pop %v428
  %v687 = vtanh.pop %v433
  %v688 = vtanh.pop %v438
  %v689 = vtanh.pop %v443
  %v690 = vtanh.pop %v448
  %v691 = vtanh.pop %v453
  %v692 = vtanh.pop %v458
  %v693 = vtanh.pop %v463
  %v694 = vtanh.pop %v468
  %v695 = vtanh.pop %v473
  %v696 = vtanh.pop %v478
  %v697 = vtanh.pop %v483
  %v698 = vtanh.pop %v488
  %v699 = vtanh.pop %v493
  %v700 = vtanh.pop %v498
  %v701 = vtanh.pop %v503
  %v702 = vtanh.pop %v508
  %v703 = vtanh.pop %v513
  %v704 = vtanh.pop %v518
  %v705 = vtanh.pop %v523
  %v706 = vtanh.pop %v528
  %v707 = vtanh.pop %v533
  %v708 = vtanh.pop %v538
  %v709 = vtanh.pop %v543
  %v710 = vtanh.pop %v548
  %v711 = vtanh.pop %v553
  %v712 = vtanh.pop %v558
  %v713 = vtanh.pop %v563
  %v714 = vtanh.pop %v568
  %v715 = vtanh.pop %v573
  %v716 = vtanh.pop %v578
  %v717 = vtanh.pop %v583
  %v718 = vtanh.pop %v588
  %v719 = vtanh.pop %v593
  %v720 = vtanh.pop %v598
  %v721 = vtanh.pop %v603
  %v722 = vtanh.pop %v608
  %v723 = vtanh.pop %v613
  %v724 = vtanh.pop %v618
  %v725 = vtanh.pop %v623
  %v726 = vtanh.pop %v628
  %v727 = vtanh.pop %v633
  %v728 = vtanh.pop %v638
  %v729 = vtanh.pop %v643
  %v730 = vtanh.pop %v648
  %v731 = vtanh.pop %v653
  %v732 = vtanh.pop %v658
  %v733 = vtanh.pop %v663
  %v734 = vtanh.pop %v668
  %v735 = vld [vmem:[%s3] sm:$0xff]
  %v736 = vld [vmem:[%s3 + $0x8] sm:$0xff]
  %v737 = vld [vmem:[%s3 + $0x10] sm:$0xff]
  %v738 = vld [vmem:[%s3 + $0x18] sm:$0xff]
  %v739 = vld [vmem:[%s4] sm:$0x1]
  %v741 = vlaneseq
  %v742 = vshrl.u32 %v741, 7
  %v743 = vsub.s32 0, %v742
  %v744 = vrot.slane %v739, %v743
  %vm746 = vcmask 261120
  %v748 = vsel %vm746, %v671, 0
  %v751 = vsel %vm746, %v672, 0
  %v754 = vsel %vm746, %v673, 0
  %v757 = vsel %vm746, %v674, 0
  %v760 = vsel %vm746, %v675, 0
  %v763 = vsel %vm746, %v676, 0
  %v766 = vsel %vm746, %v677, 0
  %v769 = vsel %vm746, %v678, 0
  %v772 = vsel %vm746, %v679, 0
  %v775 = vsel %vm746, %v680, 0
  %v778 = vsel %vm746, %v681, 0
  %v781 = vsel %vm746, %v682, 0
  %v784 = vsel %vm746, %v683, 0
  %v787 = vsel %vm746, %v684, 0
  %v790 = vsel %vm746, %v685, 0
  %v793 = vsel %vm746, %v686, 0
  %v796 = vsel %vm746, %v687, 0
  %v799 = vsel %vm746, %v688, 0
  %v802 = vsel %vm746, %v689, 0
  %v805 = vsel %vm746, %v690, 0
  %v808 = vsel %vm746, %v691, 0
  %v811 = vsel %vm746, %v692, 0
  %v814 = vsel %vm746, %v693, 0
  %v817 = vsel %vm746, %v694, 0
  %v820 = vsel %vm746, %v695, 0
  %v823 = vsel %vm746, %v696, 0
  %v826 = vsel %vm746, %v697, 0
  %v829 = vsel %vm746, %v698, 0
  %v832 = vsel %vm746, %v699, 0
  %v835 = vsel %vm746, %v700, 0
  %v838 = vsel %vm746, %v701, 0
  %v841 = vsel %vm746, %v702, 0
  %v844 = vsel %vm746, %v703, 0
  %v847 = vsel %vm746, %v704, 0
  %v850 = vsel %vm746, %v705, 0
  %v853 = vsel %vm746, %v706, 0
  %v856 = vsel %vm746, %v707, 0
  %v859 = vsel %vm746, %v708, 0
  %v862 = vsel %vm746, %v709, 0
  %v865 = vsel %vm746, %v710, 0
  %v868 = vsel %vm746, %v711, 0
  %v871 = vsel %vm746, %v712, 0
  %v874 = vsel %vm746, %v713, 0
  %v877 = vsel %vm746, %v714, 0
  %v880 = vsel %vm746, %v715, 0
  %v883 = vsel %vm746, %v716, 0
  %v886 = vsel %vm746, %v717, 0
  %v889 = vsel %vm746, %v718, 0
  %v892 = vsel %vm746, %v719, 0
  %v895 = vsel %vm746, %v720, 0
  %v898 = vsel %vm746, %v721, 0
  %v901 = vsel %vm746, %v722, 0
  %v904 = vsel %vm746, %v723, 0
  %v907 = vsel %vm746, %v724, 0
  %v910 = vsel %vm746, %v725, 0
  %v913 = vsel %vm746, %v726, 0
  %v916 = vsel %vm746, %v727, 0
  %v919 = vsel %vm746, %v728, 0
  %v922 = vsel %vm746, %v729, 0
  %v925 = vsel %vm746, %v730, 0
  %v928 = vsel %vm746, %v731, 0
  %v931 = vsel %vm746, %v732, 0
  %v934 = vsel %vm746, %v733, 0
  %v937 = vsel %vm746, %v734, 0
  %939 = vmatprep.subr.mxu0 0.0
  %940 = vmatpush1.msra.mxu0 %v735
  %941 = vmatprep.subr.mxu0 0.0
  %942 = vmatpush1.msra.mxu0 %v736
  %943 = vmatprep.subr.mxu0 0.0
  %944 = vmatpush1.msra.mxu0 %v737
  %945 = vmatprep.subr.mxu0 0.0
  %946 = vmatpush1.msra.mxu0 %v738
  %947 = vmatprep.subr.mxu0 0.0
  %948 = vmatpush1.msra.mxu0 0.0
  %949 = vmatprep.subr.mxu0 0.0
  %950 = vmatpush1.msra.mxu0 0.0
  %951 = vmatprep.subr.mxu0 0.0
  %952 = vmatpush1.msra.mxu0 0.0
  %953 = vmatprep.subr.mxu0 0.0
  %954 = vmatpush1.msra.mxu0 0.0
  %955 = vmatprep.subr.mxu0 0.0
  %956 = vmatpush1.msra.mxu0 0.0
  %957 = vmatprep.subr.mxu0 0.0
  %958 = vmatpush1.msra.mxu0 0.0
  %959 = vmatprep.subr.mxu0 0.0
  %960 = vmatpush1.msra.mxu0 0.0
  %961 = vmatprep.subr.mxu0 0.0
  %962 = vmatpush1.msra.mxu0 0.0
  %963 = vmatprep.subr.mxu0 0.0
  %964 = vmatpush1.msra.mxu0 0.0
  %965 = vmatprep.subr.mxu0 0.0
  %966 = vmatpush1.msra.mxu0 0.0
  %967 = vmatprep.subr.mxu0 0.0
  %968 = vmatpush1.msra.mxu0 0.0
  %969 = vmatprep.subr.mxu0 0.0
  %970 = vmatpush1.msra.mxu0 0.0
  %971 = vmatprep.subr.mxu0 0.0
  %972 = vmatpush1.msra.mxu0 0.0
  %973 = vmatprep.subr.mxu0 0.0
  %974 = vmatpush1.msra.mxu0 0.0
  %975 = vmatprep.subr.mxu0 0.0
  %976 = vmatpush1.msra.mxu0 0.0
  %977 = vmatprep.subr.mxu0 0.0
  %978 = vmatpush1.msra.mxu0 0.0
  %979 = vmatprep.subr.mxu0 0.0
  %980 = vmatpush1.msra.mxu0 0.0
  %981 = vmatprep.subr.mxu0 0.0
  %982 = vmatpush1.msra.mxu0 0.0
  %983 = vmatprep.subr.mxu0 0.0
  %984 = vmatpush1.msra.mxu0 0.0
  %985 = vmatprep.subr.mxu0 0.0
  %986 = vmatpush1.msra.mxu0 0.0
  %987 = vmatprep.subr.mxu0 0.0
  %988 = vmatpush1.msra.mxu0 0.0
  %989 = vmatprep.subr.mxu0 0.0
  %990 = vmatpush1.msra.mxu0 0.0
  %991 = vmatprep.subr.mxu0 0.0
  %992 = vmatpush1.msra.mxu0 0.0
  %993 = vmatprep.subr.mxu0 0.0
  %994 = vmatpush1.msra.mxu0 0.0
  %995 = vmatprep.subr.mxu0 0.0
  %996 = vmatpush1.msra.mxu0 0.0
  %997 = vmatprep.subr.mxu0 0.0
  %998 = vmatpush1.msra.mxu0 0.0
  %999 = vmatprep.subr.mxu0 0.0
  %1000 = vmatpush1.msra.mxu0 0.0
  %1001 = vmatprep.subr.mxu0 0.0
  %1002 = vmatpush1.msra.mxu0 0.0
  %1003 = vmatprep.mubr.f32.mxu0 0.0
  %1004 = vmatmul.mubr.f32.gmra.mrb[0].mxu0 %v748
  %v1005 = vpop.f32.mrb[0].mxu0
  %v1006 = vadd.f32 %v744, %v1005
  %v1007 = vpop.f32.mrb[0].mxu0
  %1008 = vmatprep.mubr.f32.mxu0 0.0
  %1009 = vmatmul.mubr.f32.gmra.mrb[0].mxu0 %v751
  %v1010 = vpop.f32.mrb[0].mxu0
  %v1011 = vadd.f32 %v744, %v1010
  %v1012 = vpop.f32.mrb[0].mxu0
  %1013 = vmatprep.mubr.f32.mxu0 0.0
  %1014 = vmatmul.mubr.f32.gmra.mrb[0].mxu0 %v754
  %v1015 = vpop.f32.mrb[0].mxu0
  %v1016 = vadd.f32 %v744, %v1015
  %v1017 = vpop.f32.mrb[0].mxu0
  %1018 = vmatprep.mubr.f32.mxu0 0.0
  %1019 = vmatmul.mubr.f32.gmra.mrb[0].mxu0 %v757
  %v1020 = vpop.f32.mrb[0].mxu0
  %v1021 = vadd.f32 %v744, %v1020
  %v1022 = vpop.f32.mrb[0].mxu0
  %1023 = vmatprep.mubr.f32.mxu0 0.0
  %1024 = vmatmul.mubr.f32.gmra.mrb[0].mxu0 %v760
  %v1025 = vpop.f32.mrb[0].mxu0
  %v1026 = vadd.f32 %v744, %v1025
  %v1027 = vpop.f32.mrb[0].mxu0
  %1028 = vmatprep.mubr.f32.mxu0 0.0
  %1029 = vmatmul.mubr.f32.gmra.mrb[0].mxu0 %v763
  %v1030 = vpop.f32.mrb[0].mxu0
  %v1031 = vadd.f32 %v744, %v1030
  %v1032 = vpop.f32.mrb[0].mxu0
  %1033 = vmatprep.mubr.f32.mxu0 0.0
  %1034 = vmatmul.mubr.f32.gmra.mrb[0].mxu0 %v766
  %v1035 = vpop.f32.mrb[0].mxu0
  %v1036 = vadd.f32 %v744, %v1035
  %v1037 = vpop.f32.mrb[0].mxu0
  %1038 = vmatprep.mubr.f32.mxu0 0.0
  %1039 = vmatmul.mubr.f32.gmra.mrb[0].mxu0 %v769
  %v1040 = vpop.f32.mrb[0].mxu0
  %v1041 = vadd.f32 %v744, %v1040
  %v1042 = vpop.f32.mrb[0].mxu0
  %1043 = vmatprep.mubr.f32.mxu0 0.0
  %1044 = vmatmul.mubr.f32.gmra.mrb[0].mxu0 %v772
  %v1045 = vpop.f32.mrb[0].mxu0
  %v1046 = vadd.f32 %v744, %v1045
  %v1047 = vpop.f32.mrb[0].mxu0
  %1048 = vmatprep.mubr.f32.mxu0 0.0
  %1049 = vmatmul.mubr.f32.gmra.mrb[0].mxu0 %v775
  %v1050 = vpop.f32.mrb[0].mxu0
  %v1051 = vadd.f32 %v744, %v1050
  %v1052 = vpop.f32.mrb[0].mxu0
  %1053 = vmatprep.mubr.f32.mxu0 0.0
  %1054 = vmatmul.mubr.f32.gmra.mrb[0].mxu0 %v778
  %v1055 = vpop.f32.mrb[0].mxu0
  %v1056 = vadd.f32 %v744, %v1055
  %v1057 = vpop.f32.mrb[0].mxu0
  %1058 = vmatprep.mubr.f32.mxu0 0.0
  %1059 = vmatmul.mubr.f32.gmra.mrb[0].mxu0 %v781
  %v1060 = vpop.f32.mrb[0].mxu0
  %v1061 = vadd.f32 %v744, %v1060
  %v1062 = vpop.f32.mrb[0].mxu0
  %1063 = vmatprep.mubr.f32.mxu0 0.0
  %1064 = vmatmul.mubr.f32.gmra.mrb[0].mxu0 %v784
  %v1065 = vpop.f32.mrb[0].mxu0
  %v1066 = vadd.f32 %v744, %v1065
  %v1067 = vpop.f32.mrb[0].mxu0
  %1068 = vmatprep.mubr.f32.mxu0 0.0
  %1069 = vmatmul.mubr.f32.gmra.mrb[0].mxu0 %v787
  %v1070 = vpop.f32.mrb[0].mxu0
  %v1071 = vadd.f32 %v744, %v1070
  %v1072 = vpop.f32.mrb[0].mxu0
  %1073 = vmatprep.mubr.f32.mxu0 0.0
  %1074 = vmatmul.mubr.f32.gmra.mrb[0].mxu0 %v790
  %v1075 = vpop.f32.mrb[0].mxu0
  %v1076 = vadd.f32 %v744, %v1075
  %v1077 = vpop.f32.mrb[0].mxu0
  %1078 = vmatprep.mubr.f32.mxu0 0.0
  %1079 = vmatmul.mubr.f32.gmra.mrb[0].mxu0 %v793
  %v1080 = vpop.f32.mrb[0].mxu0
  %v1081 = vadd.f32 %v744, %v1080
  %v1082 = vpop.f32.mrb[0].mxu0
  %1083 = vmatprep.mubr.f32.mxu0 0.0
  %1084 = vmatmul.mubr.f32.gmra.mrb[0].mxu0 %v796
  %v1085 = vpop.f32.mrb[0].mxu0
  %v1086 = vadd.f32 %v744, %v1085
  %v1087 = vpop.f32.mrb[0].mxu0
  %1088 = vmatprep.mubr.f32.mxu0 0.0
  %1089 = vmatmul.mubr.f32.gmra.mrb[0].mxu0 %v799
  %v1090 = vpop.f32.mrb[0].mxu0
  %v1091 = vadd.f32 %v744, %v1090
  %v1092 = vpop.f32.mrb[0].mxu0
  %1093 = vmatprep.mubr.f32.mxu0 0.0
  %1094 = vmatmul.mubr.f32.gmra.mrb[0].mxu0 %v802
  %v1095 = vpop.f32.mrb[0].mxu0
  %v1096 = vadd.f32 %v744, %v1095
  %v1097 = vpop.f32.mrb[0].mxu0
  %1098 = vmatprep.mubr.f32.mxu0 0.0
  %1099 = vmatmul.mubr.f32.gmra.mrb[0].mxu0 %v805
  %v1100 = vpop.f32.mrb[0].mxu0
  %v1101 = vadd.f32 %v744, %v1100
  %v1102 = vpop.f32.mrb[0].mxu0
  %1103 = vmatprep.mubr.f32.mxu0 0.0
  %1104 = vmatmul.mubr.f32.gmra.mrb[0].mxu0 %v808
  %v1105 = vpop.f32.mrb[0].mxu0
  %v1106 = vadd.f32 %v744, %v1105
  %v1107 = vpop.f32.mrb[0].mxu0
  %1108 = vmatprep.mubr.f32.mxu0 0.0
  %1109 = vmatmul.mubr.f32.gmra.mrb[0].mxu0 %v811
  %v1110 = vpop.f32.mrb[0].mxu0
  %v1111 = vadd.f32 %v744, %v1110
  %v1112 = vpop.f32.mrb[0].mxu0
  %1113 = vmatprep.mubr.f32.mxu0 0.0
  %1114 = vmatmul.mubr.f32.gmra.mrb[0].mxu0 %v814
  %v1115 = vpop.f32.mrb[0].mxu0
  %v1116 = vadd.f32 %v744, %v1115
  %v1117 = vpop.f32.mrb[0].mxu0
  %1118 = vmatprep.mubr.f32.mxu0 0.0
  %1119 = vmatmul.mubr.f32.gmra.mrb[0].mxu0 %v817
  %v1120 = vpop.f32.mrb[0].mxu0
  %v1121 = vadd.f32 %v744, %v1120
  %v1122 = vpop.f32.mrb[0].mxu0
  %1123 = vmatprep.mubr.f32.mxu0 0.0
  %1124 = vmatmul.mubr.f32.gmra.mrb[0].mxu0 %v820
  %v1125 = vpop.f32.mrb[0].mxu0
  %v1126 = vadd.f32 %v744, %v1125
  %v1127 = vpop.f32.mrb[0].mxu0
  %1128 = vmatprep.mubr.f32.mxu0 0.0
  %1129 = vmatmul.mubr.f32.gmra.mrb[0].mxu0 %v823
  %v1130 = vpop.f32.mrb[0].mxu0
  %v1131 = vadd.f32 %v744, %v1130
  %v1132 = vpop.f32.mrb[0].mxu0
  %1133 = vmatprep.mubr.f32.mxu0 0.0
  %1134 = vmatmul.mubr.f32.gmra.mrb[0].mxu0 %v826
  %v1135 = vpop.f32.mrb[0].mxu0
  %v1136 = vadd.f32 %v744, %v1135
  %v1137 = vpop.f32.mrb[0].mxu0
  %1138 = vmatprep.mubr.f32.mxu0 0.0
  %1139 = vmatmul.mubr.f32.gmra.mrb[0].mxu0 %v829
  %v1140 = vpop.f32.mrb[0].mxu0
  %v1141 = vadd.f32 %v744, %v1140
  %v1142 = vpop.f32.mrb[0].mxu0
  %1143 = vmatprep.mubr.f32.mxu0 0.0
  %1144 = vmatmul.mubr.f32.gmra.mrb[0].mxu0 %v832
  %v1145 = vpop.f32.mrb[0].mxu0
  %v1146 = vadd.f32 %v744, %v1145
  %v1147 = vpop.f32.mrb[0].mxu0
  %1148 = vmatprep.mubr.f32.mxu0 0.0
  %1149 = vmatmul.mubr.f32.gmra.mrb[0].mxu0 %v835
  %v1150 = vpop.f32.mrb[0].mxu0
  %v1151 = vadd.f32 %v744, %v1150
  %v1152 = vpop.f32.mrb[0].mxu0
  %1153 = vmatprep.mubr.f32.mxu0 0.0
  %1154 = vmatmul.mubr.f32.gmra.mrb[0].mxu0 %v838
  %v1155 = vpop.f32.mrb[0].mxu0
  %v1156 = vadd.f32 %v744, %v1155
  %v1157 = vpop.f32.mrb[0].mxu0
  %1158 = vmatprep.mubr.f32.mxu0 0.0
  %1159 = vmatmul.mubr.f32.gmra.mrb[0].mxu0 %v841
  %v1160 = vpop.f32.mrb[0].mxu0
  %v1161 = vadd.f32 %v744, %v1160
  %v1162 = vpop.f32.mrb[0].mxu0
  %1163 = vmatprep.mubr.f32.mxu0 0.0
  %1164 = vmatmul.mubr.f32.gmra.mrb[0].mxu0 %v844
  %v1165 = vpop.f32.mrb[0].mxu0
  %v1166 = vadd.f32 %v744, %v1165
  %v1167 = vpop.f32.mrb[0].mxu0
  %1168 = vmatprep.mubr.f32.mxu0 0.0
  %1169 = vmatmul.mubr.f32.gmra.mrb[0].mxu0 %v847
  %v1170 = vpop.f32.mrb[0].mxu0
  %v1171 = vadd.f32 %v744, %v1170
  %v1172 = vpop.f32.mrb[0].mxu0
  %1173 = vmatprep.mubr.f32.mxu0 0.0
  %1174 = vmatmul.mubr.f32.gmra.mrb[0].mxu0 %v850
  %v1175 = vpop.f32.mrb[0].mxu0
  %v1176 = vadd.f32 %v744, %v1175
  %v1177 = vpop.f32.mrb[0].mxu0
  %1178 = vmatprep.mubr.f32.mxu0 0.0
  %1179 = vmatmul.mubr.f32.gmra.mrb[0].mxu0 %v853
  %v1180 = vpop.f32.mrb[0].mxu0
  %v1181 = vadd.f32 %v744, %v1180
  %v1182 = vpop.f32.mrb[0].mxu0
  %1183 = vmatprep.mubr.f32.mxu0 0.0
  %1184 = vmatmul.mubr.f32.gmra.mrb[0].mxu0 %v856
  %v1185 = vpop.f32.mrb[0].mxu0
  %v1186 = vadd.f32 %v744, %v1185
  %v1187 = vpop.f32.mrb[0].mxu0
  %1188 = vmatprep.mubr.f32.mxu0 0.0
  %1189 = vmatmul.mubr.f32.gmra.mrb[0].mxu0 %v859
  %v1190 = vpop.f32.mrb[0].mxu0
  %v1191 = vadd.f32 %v744, %v1190
  %v1192 = vpop.f32.mrb[0].mxu0
  %1193 = vmatprep.mubr.f32.mxu0 0.0
  %1194 = vmatmul.mubr.f32.gmra.mrb[0].mxu0 %v862
  %v1195 = vpop.f32.mrb[0].mxu0
  %v1196 = vadd.f32 %v744, %v1195
  %v1197 = vpop.f32.mrb[0].mxu0
  %1198 = vmatprep.mubr.f32.mxu0 0.0
  %1199 = vmatmul.mubr.f32.gmra.mrb[0].mxu0 %v865
  %v1200 = vpop.f32.mrb[0].mxu0
  %v1201 = vadd.f32 %v744, %v1200
  %v1202 = vpop.f32.mrb[0].mxu0
  %1203 = vmatprep.mubr.f32.mxu0 0.0
  %1204 = vmatmul.mubr.f32.gmra.mrb[0].mxu0 %v868
  %v1205 = vpop.f32.mrb[0].mxu0
  %v1206 = vadd.f32 %v744, %v1205
  %v1207 = vpop.f32.mrb[0].mxu0
  %1208 = vmatprep.mubr.f32.mxu0 0.0
  %1209 = vmatmul.mubr.f32.gmra.mrb[0].mxu0 %v871
  %v1210 = vpop.f32.mrb[0].mxu0
  %v1211 = vadd.f32 %v744, %v1210
  %v1212 = vpop.f32.mrb[0].mxu0
  %1213 = vmatprep.mubr.f32.mxu0 0.0
  %1214 = vmatmul.mubr.f32.gmra.mrb[0].mxu0 %v874
  %v1215 = vpop.f32.mrb[0].mxu0
  %v1216 = vadd.f32 %v744, %v1215
  %v1217 = vpop.f32.mrb[0].mxu0
  %1218 = vmatprep.mubr.f32.mxu0 0.0
  %1219 = vmatmul.mubr.f32.gmra.mrb[0].mxu0 %v877
  %v1220 = vpop.f32.mrb[0].mxu0
  %v1221 = vadd.f32 %v744, %v1220
  %v1222 = vpop.f32.mrb[0].mxu0
  %1223 = vmatprep.mubr.f32.mxu0 0.0
  %1224 = vmatmul.mubr.f32.gmra.mrb[0].mxu0 %v880
  %v1225 = vpop.f32.mrb[0].mxu0
  %v1226 = vadd.f32 %v744, %v1225
  %v1227 = vpop.f32.mrb[0].mxu0
  %1228 = vmatprep.mubr.f32.mxu0 0.0
  %1229 = vmatmul.mubr.f32.gmra.mrb[0].mxu0 %v883
  %v1230 = vpop.f32.mrb[0].mxu0
  %v1231 = vadd.f32 %v744, %v1230
  %v1232 = vpop.f32.mrb[0].mxu0
  %1233 = vmatprep.mubr.f32.mxu0 0.0
  %1234 = vmatmul.mubr.f32.gmra.mrb[0].mxu0 %v886
  %v1235 = vpop.f32.mrb[0].mxu0
  %v1236 = vadd.f32 %v744, %v1235
  %v1237 = vpop.f32.mrb[0].mxu0
  %1238 = vmatprep.mubr.f32.mxu0 0.0
  %1239 = vmatmul.mubr.f32.gmra.mrb[0].mxu0 %v889
  %v1240 = vpop.f32.mrb[0].mxu0
  %v1241 = vadd.f32 %v744, %v1240
  %v1242 = vpop.f32.mrb[0].mxu0
  %1243 = vmatprep.mubr.f32.mxu0 0.0
  %1244 = vmatmul.mubr.f32.gmra.mrb[0].mxu0 %v892
  %v1245 = vpop.f32.mrb[0].mxu0
  %v1246 = vadd.f32 %v744, %v1245
  %v1247 = vpop.f32.mrb[0].mxu0
  %1248 = vmatprep.mubr.f32.mxu0 0.0
  %1249 = vmatmul.mubr.f32.gmra.mrb[0].mxu0 %v895
  %v1250 = vpop.f32.mrb[0].mxu0
  %v1251 = vadd.f32 %v744, %v1250
  %v1252 = vpop.f32.mrb[0].mxu0
  %1253 = vmatprep.mubr.f32.mxu0 0.0
  %1254 = vmatmul.mubr.f32.gmra.mrb[0].mxu0 %v898
  %v1255 = vpop.f32.mrb[0].mxu0
  %v1256 = vadd.f32 %v744, %v1255
  %v1257 = vpop.f32.mrb[0].mxu0
  %1258 = vmatprep.mubr.f32.mxu0 0.0
  %1259 = vmatmul.mubr.f32.gmra.mrb[0].mxu0 %v901
  %v1260 = vpop.f32.mrb[0].mxu0
  %v1261 = vadd.f32 %v744, %v1260
  %v1262 = vpop.f32.mrb[0].mxu0
  %1263 = vmatprep.mubr.f32.mxu0 0.0
  %1264 = vmatmul.mubr.f32.gmra.mrb[0].mxu0 %v904
  %v1265 = vpop.f32.mrb[0].mxu0
  %v1266 = vadd.f32 %v744, %v1265
  %v1267 = vpop.f32.mrb[0].mxu0
  %1268 = vmatprep.mubr.f32.mxu0 0.0
  %1269 = vmatmul.mubr.f32.gmra.mrb[0].mxu0 %v907
  %v1270 = vpop.f32.mrb[0].mxu0
  %v1271 = vadd.f32 %v744, %v1270
  %v1272 = vpop.f32.mrb[0].mxu0
  %1273 = vmatprep.mubr.f32.mxu0 0.0
  %1274 = vmatmul.mubr.f32.gmra.mrb[0].mxu0 %v910
  %v1275 = vpop.f32.mrb[0].mxu0
  %v1276 = vadd.f32 %v744, %v1275
  %v1277 = vpop.f32.mrb[0].mxu0
  %1278 = vmatprep.mubr.f32.mxu0 0.0
  %1279 = vmatmul.mubr.f32.gmra.mrb[0].mxu0 %v913
  %v1280 = vpop.f32.mrb[0].mxu0
  %v1281 = vadd.f32 %v744, %v1280
  %v1282 = vpop.f32.mrb[0].mxu0
  %1283 = vmatprep.mubr.f32.mxu0 0.0
  %1284 = vmatmul.mubr.f32.gmra.mrb[0].mxu0 %v916
  %v1285 = vpop.f32.mrb[0].mxu0
  %v1286 = vadd.f32 %v744, %v1285
  %v1287 = vpop.f32.mrb[0].mxu0
  %1288 = vmatprep.mubr.f32.mxu0 0.0
  %1289 = vmatmul.mubr.f32.gmra.mrb[0].mxu0 %v919
  %v1290 = vpop.f32.mrb[0].mxu0
  %v1291 = vadd.f32 %v744, %v1290
  %v1292 = vpop.f32.mrb[0].mxu0
  %1293 = vmatprep.mubr.f32.mxu0 0.0
  %1294 = vmatmul.mubr.f32.gmra.mrb[0].mxu0 %v922
  %v1295 = vpop.f32.mrb[0].mxu0
  %v1296 = vadd.f32 %v744, %v1295
  %v1297 = vpop.f32.mrb[0].mxu0
  %1298 = vmatprep.mubr.f32.mxu0 0.0
  %1299 = vmatmul.mubr.f32.gmra.mrb[0].mxu0 %v925
  %v1300 = vpop.f32.mrb[0].mxu0
  %v1301 = vadd.f32 %v744, %v1300
  %v1302 = vpop.f32.mrb[0].mxu0
  %1303 = vmatprep.mubr.f32.mxu0 0.0
  %1304 = vmatmul.mubr.f32.gmra.mrb[0].mxu0 %v928
  %v1305 = vpop.f32.mrb[0].mxu0
  %v1306 = vadd.f32 %v744, %v1305
  %v1307 = vpop.f32.mrb[0].mxu0
  %1308 = vmatprep.mubr.f32.mxu0 0.0
  %1309 = vmatmul.mubr.f32.gmra.mrb[0].mxu0 %v931
  %v1310 = vpop.f32.mrb[0].mxu0
  %v1311 = vadd.f32 %v744, %v1310
  %v1312 = vpop.f32.mrb[0].mxu0
  %1313 = vmatprep.mubr.f32.mxu0 0.0
  %1314 = vmatmul.mubr.f32.gmra.mrb[0].mxu0 %v934
  %v1315 = vpop.f32.mrb[0].mxu0
  %v1316 = vadd.f32 %v744, %v1315
  %v1317 = vpop.f32.mrb[0].mxu0
  %1318 = vmatprep.mubr.f32.mxu0 0.0
  %1319 = vmatmul.mubr.f32.gmra.mrb[0].mxu0 %v937
  %v1320 = vpop.f32.mrb[0].mxu0
  %v1321 = vadd.f32 %v744, %v1320
  %v1322 = vpop.f32.mrb[0].mxu0
  %1323 = vdwg.mxu0
  %v1324 = vtanh.pop %v1006
  %v1325 = vtanh.pop %v1011
  %v1326 = vtanh.pop %v1016
  %v1327 = vtanh.pop %v1021
  %v1328 = vtanh.pop %v1026
  %v1329 = vtanh.pop %v1031
  %v1330 = vtanh.pop %v1036
  %v1331 = vtanh.pop %v1041
  %v1332 = vtanh.pop %v1046
  %v1333 = vtanh.pop %v1051
  %v1334 = vtanh.pop %v1056
  %v1335 = vtanh.pop %v1061
  %v1336 = vtanh.pop %v1066
  %v1337 = vtanh.pop %v1071
  %v1338 = vtanh.pop %v1076
  %v1339 = vtanh.pop %v1081
  %v1340 = vtanh.pop %v1086
  %v1341 = vtanh.pop %v1091
  %v1342 = vtanh.pop %v1096
  %v1343 = vtanh.pop %v1101
  %v1344 = vtanh.pop %v1106
  %v1345 = vtanh.pop %v1111
  %v1346 = vtanh.pop %v1116
  %v1347 = vtanh.pop %v1121
  %v1348 = vtanh.pop %v1126
  %v1349 = vtanh.pop %v1131
  %v1350 = vtanh.pop %v1136
  %v1351 = vtanh.pop %v1141
  %v1352 = vtanh.pop %v1146
  %v1353 = vtanh.pop %v1151
  %v1354 = vtanh.pop %v1156
  %v1355 = vtanh.pop %v1161
  %v1356 = vtanh.pop %v1166
  %v1357 = vtanh.pop %v1171
  %v1358 = vtanh.pop %v1176
  %v1359 = vtanh.pop %v1181
  %v1360 = vtanh.pop %v1186
  %v1361 = vtanh.pop %v1191
  %v1362 = vtanh.pop %v1196
  %v1363 = vtanh.pop %v1201
  %v1364 = vtanh.pop %v1206
  %v1365 = vtanh.pop %v1211
  %v1366 = vtanh.pop %v1216
  %v1367 = vtanh.pop %v1221
  %v1368 = vtanh.pop %v1226
  %v1369 = vtanh.pop %v1231
  %v1370 = vtanh.pop %v1236
  %v1371 = vtanh.pop %v1241
  %v1372 = vtanh.pop %v1246
  %v1373 = vtanh.pop %v1251
  %v1374 = vtanh.pop %v1256
  %v1375 = vtanh.pop %v1261
  %v1376 = vtanh.pop %v1266
  %v1377 = vtanh.pop %v1271
  %v1378 = vtanh.pop %v1276
  %v1379 = vtanh.pop %v1281
  %v1380 = vtanh.pop %v1286
  %v1381 = vtanh.pop %v1291
  %v1382 = vtanh.pop %v1296
  %v1383 = vtanh.pop %v1301
  %v1384 = vtanh.pop %v1306
  %v1385 = vtanh.pop %v1311
  %v1386 = vtanh.pop %v1316
  %v1387 = vtanh.pop %v1321
  %v1388 = vxor.u32 %v1324, 2147483648
  %v1389 = vxor.u32 %v1325, 2147483648
  %v1390 = vxor.u32 %v1326, 2147483648
  %v1391 = vxor.u32 %v1327, 2147483648
  %v1392 = vxor.u32 %v1328, 2147483648
  %v1393 = vxor.u32 %v1329, 2147483648
  %v1394 = vxor.u32 %v1330, 2147483648
  %v1395 = vxor.u32 %v1331, 2147483648
  %v1396 = vxor.u32 %v1332, 2147483648
  %v1397 = vxor.u32 %v1333, 2147483648
  %v1398 = vxor.u32 %v1334, 2147483648
  %v1399 = vxor.u32 %v1335, 2147483648
  %v1400 = vxor.u32 %v1336, 2147483648
  %v1401 = vxor.u32 %v1337, 2147483648
  %v1402 = vxor.u32 %v1338, 2147483648
  %v1403 = vxor.u32 %v1339, 2147483648
  %v1404 = vxor.u32 %v1340, 2147483648
  %v1405 = vxor.u32 %v1341, 2147483648
  %v1406 = vxor.u32 %v1342, 2147483648
  %v1407 = vxor.u32 %v1343, 2147483648
  %v1408 = vxor.u32 %v1344, 2147483648
  %v1409 = vxor.u32 %v1345, 2147483648
  %v1410 = vxor.u32 %v1346, 2147483648
  %v1411 = vxor.u32 %v1347, 2147483648
  %v1412 = vxor.u32 %v1348, 2147483648
  %v1413 = vxor.u32 %v1349, 2147483648
  %v1414 = vxor.u32 %v1350, 2147483648
  %v1415 = vxor.u32 %v1351, 2147483648
  %v1416 = vxor.u32 %v1352, 2147483648
  %v1417 = vxor.u32 %v1353, 2147483648
  %v1418 = vxor.u32 %v1354, 2147483648
  %v1419 = vxor.u32 %v1355, 2147483648
  %v1420 = vxor.u32 %v1356, 2147483648
  %v1421 = vxor.u32 %v1357, 2147483648
  %v1422 = vxor.u32 %v1358, 2147483648
  %v1423 = vxor.u32 %v1359, 2147483648
  %v1424 = vxor.u32 %v1360, 2147483648
  %v1425 = vxor.u32 %v1361, 2147483648
  %v1426 = vxor.u32 %v1362, 2147483648
  %v1427 = vxor.u32 %v1363, 2147483648
  %v1428 = vxor.u32 %v1364, 2147483648
  %v1429 = vxor.u32 %v1365, 2147483648
  %v1430 = vxor.u32 %v1366, 2147483648
  %v1431 = vxor.u32 %v1367, 2147483648
  %v1432 = vxor.u32 %v1368, 2147483648
  %v1433 = vxor.u32 %v1369, 2147483648
  %v1434 = vxor.u32 %v1370, 2147483648
  %v1435 = vxor.u32 %v1371, 2147483648
  %v1436 = vxor.u32 %v1372, 2147483648
  %v1437 = vxor.u32 %v1373, 2147483648
  %v1438 = vxor.u32 %v1374, 2147483648
  %v1439 = vxor.u32 %v1375, 2147483648
  %v1440 = vxor.u32 %v1376, 2147483648
  %v1441 = vxor.u32 %v1377, 2147483648
  %v1442 = vxor.u32 %v1378, 2147483648
  %v1443 = vxor.u32 %v1379, 2147483648
  %v1444 = vxor.u32 %v1380, 2147483648
  %v1445 = vxor.u32 %v1381, 2147483648
  %v1446 = vxor.u32 %v1382, 2147483648
  %v1447 = vxor.u32 %v1383, 2147483648
  %v1448 = vxor.u32 %v1384, 2147483648
  %v1449 = vxor.u32 %v1385, 2147483648
  %v1450 = vxor.u32 %v1386, 2147483648
  %v1451 = vxor.u32 %v1387, 2147483648
  %v1452 = vmul.f32 %v1388, 1.442695
  %v1453 = vpow.pop %v1452
  %v1454 = vmul.f32 %v1389, 1.442695
  %v1455 = vpow.pop %v1454
  %v1456 = vmul.f32 %v1390, 1.442695
  %v1457 = vpow.pop %v1456
  %v1458 = vmul.f32 %v1391, 1.442695
  %v1459 = vpow.pop %v1458
  %v1460 = vmul.f32 %v1392, 1.442695
  %v1461 = vpow.pop %v1460
  %v1462 = vmul.f32 %v1393, 1.442695
  %v1463 = vpow.pop %v1462
  %v1464 = vmul.f32 %v1394, 1.442695
  %v1465 = vpow.pop %v1464
  %v1466 = vmul.f32 %v1395, 1.442695
  %v1467 = vpow.pop %v1466
  %v1468 = vmul.f32 %v1396, 1.442695
  %v1469 = vpow.pop %v1468
  %v1470 = vmul.f32 %v1397, 1.442695
  %v1471 = vpow.pop %v1470
  %v1472 = vmul.f32 %v1398, 1.442695
  %v1473 = vpow.pop %v1472
  %v1474 = vmul.f32 %v1399, 1.442695
  %v1475 = vpow.pop %v1474
  %v1476 = vmul.f32 %v1400, 1.442695
  %v1477 = vpow.pop %v1476
  %v1478 = vmul.f32 %v1401, 1.442695
  %v1479 = vpow.pop %v1478
  %v1480 = vmul.f32 %v1402, 1.442695
  %v1481 = vpow.pop %v1480
  %v1482 = vmul.f32 %v1403, 1.442695
  %v1483 = vpow.pop %v1482
  %v1484 = vmul.f32 %v1404, 1.442695
  %v1485 = vpow.pop %v1484
  %v1486 = vmul.f32 %v1405, 1.442695
  %v1487 = vpow.pop %v1486
  %v1488 = vmul.f32 %v1406, 1.442695
  %v1489 = vpow.pop %v1488
  %v1490 = vmul.f32 %v1407, 1.442695
  %v1491 = vpow.pop %v1490
  %v1492 = vmul.f32 %v1408, 1.442695
  %v1493 = vpow.pop %v1492
  %v1494 = vmul.f32 %v1409, 1.442695
  %v1495 = vpow.pop %v1494
  %v1496 = vmul.f32 %v1410, 1.442695
  %v1497 = vpow.pop %v1496
  %v1498 = vmul.f32 %v1411, 1.442695
  %v1499 = vpow.pop %v1498
  %v1500 = vmul.f32 %v1412, 1.442695
  %v1501 = vpow.pop %v1500
  %v1502 = vmul.f32 %v1413, 1.442695
  %v1503 = vpow.pop %v1502
  %v1504 = vmul.f32 %v1414, 1.442695
  %v1505 = vpow.pop %v1504
  %v1506 = vmul.f32 %v1415, 1.442695
  %v1507 = vpow.pop %v1506
  %v1508 = vmul.f32 %v1416, 1.442695
  %v1509 = vpow.pop %v1508
  %v1510 = vmul.f32 %v1417, 1.442695
  %v1511 = vpow.pop %v1510
  %v1512 = vmul.f32 %v1418, 1.442695
  %v1513 = vpow.pop %v1512
  %v1514 = vmul.f32 %v1419, 1.442695
  %v1515 = vpow.pop %v1514
  %v1516 = vmul.f32 %v1420, 1.442695
  %v1517 = vpow.pop %v1516
  %v1518 = vmul.f32 %v1421, 1.442695
  %v1519 = vpow.pop %v1518
  %v1520 = vmul.f32 %v1422, 1.442695
  %v1521 = vpow.pop %v1520
  %v1522 = vmul.f32 %v1423, 1.442695
  %v1523 = vpow.pop %v1522
  %v1524 = vmul.f32 %v1424, 1.442695
  %v1525 = vpow.pop %v1524
  %v1526 = vmul.f32 %v1425, 1.442695
  %v1527 = vpow.pop %v1526
  %v1528 = vmul.f32 %v1426, 1.442695
  %v1529 = vpow.pop %v1528
  %v1530 = vmul.f32 %v1427, 1.442695
  %v1531 = vpow.pop %v1530
  %v1532 = vmul.f32 %v1428, 1.442695
  %v1533 = vpow.pop %v1532
  %v1534 = vmul.f32 %v1429, 1.442695
  %v1535 = vpow.pop %v1534
  %v1536 = vmul.f32 %v1430, 1.442695
  %v1537 = vpow.pop %v1536
  %v1538 = vmul.f32 %v1431, 1.442695
  %v1539 = vpow.pop %v1538
  %v1540 = vmul.f32 %v1432, 1.442695
  %v1541 = vpow.pop %v1540
  %v1542 = vmul.f32 %v1433, 1.442695
  %v1543 = vpow.pop %v1542
  %v1544 = vmul.f32 %v1434, 1.442695
  %v1545 = vpow.pop %v1544
  %v1546 = vmul.f32 %v1435, 1.442695
  %v1547 = vpow.pop %v1546
  %v1548 = vmul.f32 %v1436, 1.442695
  %v1549 = vpow.pop %v1548
  %v1550 = vmul.f32 %v1437, 1.442695
  %v1551 = vpow.pop %v1550
  %v1552 = vmul.f32 %v1438, 1.442695
  %v1553 = vpow.pop %v1552
  %v1554 = vmul.f32 %v1439, 1.442695
  %v1555 = vpow.pop %v1554
  %v1556 = vmul.f32 %v1440, 1.442695
  %v1557 = vpow.pop %v1556
  %v1558 = vmul.f32 %v1441, 1.442695
  %v1559 = vpow.pop %v1558
  %v1560 = vmul.f32 %v1442, 1.442695
  %v1561 = vpow.pop %v1560
  %v1562 = vmul.f32 %v1443, 1.442695
  %v1563 = vpow.pop %v1562
  %v1564 = vmul.f32 %v1444, 1.442695
  %v1565 = vpow.pop %v1564
  %v1566 = vmul.f32 %v1445, 1.442695
  %v1567 = vpow.pop %v1566
  %v1568 = vmul.f32 %v1446, 1.442695
  %v1569 = vpow.pop %v1568
  %v1570 = vmul.f32 %v1447, 1.442695
  %v1571 = vpow.pop %v1570
  %v1572 = vmul.f32 %v1448, 1.442695
  %v1573 = vpow.pop %v1572
  %v1574 = vmul.f32 %v1449, 1.442695
  %v1575 = vpow.pop %v1574
  %v1576 = vmul.f32 %v1450, 1.442695
  %v1577 = vpow.pop %v1576
  %v1578 = vmul.f32 %v1451, 1.442695
  %v1579 = vpow.pop %v1578
  %v1580 = vadd.f32 %v1453, 1.0
  %v1581 = vadd.f32 %v1455, 1.0
  %v1582 = vadd.f32 %v1457, 1.0
  %v1583 = vadd.f32 %v1459, 1.0
  %v1584 = vadd.f32 %v1461, 1.0
  %v1585 = vadd.f32 %v1463, 1.0
  %v1586 = vadd.f32 %v1465, 1.0
  %v1587 = vadd.f32 %v1467, 1.0
  %v1588 = vadd.f32 %v1469, 1.0
  %v1589 = vadd.f32 %v1471, 1.0
  %v1590 = vadd.f32 %v1473, 1.0
  %v1591 = vadd.f32 %v1475, 1.0
  %v1592 = vadd.f32 %v1477, 1.0
  %v1593 = vadd.f32 %v1479, 1.0
  %v1594 = vadd.f32 %v1481, 1.0
  %v1595 = vadd.f32 %v1483, 1.0
  %v1596 = vadd.f32 %v1485, 1.0
  %v1597 = vadd.f32 %v1487, 1.0
  %v1598 = vadd.f32 %v1489, 1.0
  %v1599 = vadd.f32 %v1491, 1.0
  %v1600 = vadd.f32 %v1493, 1.0
  %v1601 = vadd.f32 %v1495, 1.0
  %v1602 = vadd.f32 %v1497, 1.0
  %v1603 = vadd.f32 %v1499, 1.0
  %v1604 = vadd.f32 %v1501, 1.0
  %v1605 = vadd.f32 %v1503, 1.0
  %v1606 = vadd.f32 %v1505, 1.0
  %v1607 = vadd.f32 %v1507, 1.0
  %v1608 = vadd.f32 %v1509, 1.0
  %v1609 = vadd.f32 %v1511, 1.0
  %v1610 = vadd.f32 %v1513, 1.0
  %v1611 = vadd.f32 %v1515, 1.0
  %v1612 = vadd.f32 %v1517, 1.0
  %v1613 = vadd.f32 %v1519, 1.0
  %v1614 = vadd.f32 %v1521, 1.0
  %v1615 = vadd.f32 %v1523, 1.0
  %v1616 = vadd.f32 %v1525, 1.0
  %v1617 = vadd.f32 %v1527, 1.0
  %v1618 = vadd.f32 %v1529, 1.0
  %v1619 = vadd.f32 %v1531, 1.0
  %v1620 = vadd.f32 %v1533, 1.0
  %v1621 = vadd.f32 %v1535, 1.0
  %v1622 = vadd.f32 %v1537, 1.0
  %v1623 = vadd.f32 %v1539, 1.0
  %v1624 = vadd.f32 %v1541, 1.0
  %v1625 = vadd.f32 %v1543, 1.0
  %v1626 = vadd.f32 %v1545, 1.0
  %v1627 = vadd.f32 %v1547, 1.0
  %v1628 = vadd.f32 %v1549, 1.0
  %v1629 = vadd.f32 %v1551, 1.0
  %v1630 = vadd.f32 %v1553, 1.0
  %v1631 = vadd.f32 %v1555, 1.0
  %v1632 = vadd.f32 %v1557, 1.0
  %v1633 = vadd.f32 %v1559, 1.0
  %v1634 = vadd.f32 %v1561, 1.0
  %v1635 = vadd.f32 %v1563, 1.0
  %v1636 = vadd.f32 %v1565, 1.0
  %v1637 = vadd.f32 %v1567, 1.0
  %v1638 = vadd.f32 %v1569, 1.0
  %v1639 = vadd.f32 %v1571, 1.0
  %v1640 = vadd.f32 %v1573, 1.0
  %v1641 = vadd.f32 %v1575, 1.0
  %v1642 = vadd.f32 %v1577, 1.0
  %v1643 = vadd.f32 %v1579, 1.0
  %v1644 = vrcp.pop %v1580
  %v1645 = vmul.f32 1.0, %v1644
  %v1646 = vrcp.pop %v1581
  %v1647 = vmul.f32 1.0, %v1646
  %v1648 = vrcp.pop %v1582
  %v1649 = vmul.f32 1.0, %v1648
  %v1650 = vrcp.pop %v1583
  %v1651 = vmul.f32 1.0, %v1650
  %v1652 = vrcp.pop %v1584
  %v1653 = vmul.f32 1.0, %v1652
  %v1654 = vrcp.pop %v1585
  %v1655 = vmul.f32 1.0, %v1654
  %v1656 = vrcp.pop %v1586
  %v1657 = vmul.f32 1.0, %v1656
  %v1658 = vrcp.pop %v1587
  %v1659 = vmul.f32 1.0, %v1658
  %v1660 = vrcp.pop %v1588
  %v1661 = vmul.f32 1.0, %v1660
  %v1662 = vrcp.pop %v1589
  %v1663 = vmul.f32 1.0, %v1662
  %v1664 = vrcp.pop %v1590
  %v1665 = vmul.f32 1.0, %v1664
  %v1666 = vrcp.pop %v1591
  %v1667 = vmul.f32 1.0, %v1666
  %v1668 = vrcp.pop %v1592
  %v1669 = vmul.f32 1.0, %v1668
  %v1670 = vrcp.pop %v1593
  %v1671 = vmul.f32 1.0, %v1670
  %v1672 = vrcp.pop %v1594
  %v1673 = vmul.f32 1.0, %v1672
  %v1674 = vrcp.pop %v1595
  %v1675 = vmul.f32 1.0, %v1674
  %v1676 = vrcp.pop %v1596
  %v1677 = vmul.f32 1.0, %v1676
  %v1678 = vrcp.pop %v1597
  %v1679 = vmul.f32 1.0, %v1678
  %v1680 = vrcp.pop %v1598
  %v1681 = vmul.f32 1.0, %v1680
  %v1682 = vrcp.pop %v1599
  %v1683 = vmul.f32 1.0, %v1682
  %v1684 = vrcp.pop %v1600
  %v1685 = vmul.f32 1.0, %v1684
  %v1686 = vrcp.pop %v1601
  %v1687 = vmul.f32 1.0, %v1686
  %v1688 = vrcp.pop %v1602
  %v1689 = vmul.f32 1.0, %v1688
  %v1690 = vrcp.pop %v1603
  %v1691 = vmul.f32 1.0, %v1690
  %v1692 = vrcp.pop %v1604
  %v1693 = vmul.f32 1.0, %v1692
  %v1694 = vrcp.pop %v1605
  %v1695 = vmul.f32 1.0, %v1694
  %v1696 = vrcp.pop %v1606
  %v1697 = vmul.f32 1.0, %v1696
  %v1698 = vrcp.pop %v1607
  %v1699 = vmul.f32 1.0, %v1698
  %v1700 = vrcp.pop %v1608
  %v1701 = vmul.f32 1.0, %v1700
  %v1702 = vrcp.pop %v1609
  %v1703 = vmul.f32 1.0, %v1702
  %v1704 = vrcp.pop %v1610
  %v1705 = vmul.f32 1.0, %v1704
  %v1706 = vrcp.pop %v1611
  %v1707 = vmul.f32 1.0, %v1706
  %v1708 = vrcp.pop %v1612
  %v1709 = vmul.f32 1.0, %v1708
  %v1710 = vrcp.pop %v1613
  %v1711 = vmul.f32 1.0, %v1710
  %v1712 = vrcp.pop %v1614
  %v1713 = vmul.f32 1.0, %v1712
  %v1714 = vrcp.pop %v1615
  %v1715 = vmul.f32 1.0, %v1714
  %v1716 = vrcp.pop %v1616
  %v1717 = vmul.f32 1.0, %v1716
  %v1718 = vrcp.pop %v1617
  %v1719 = vmul.f32 1.0, %v1718
  %v1720 = vrcp.pop %v1618
  %v1721 = vmul.f32 1.0, %v1720
  %v1722 = vrcp.pop %v1619
  %v1723 = vmul.f32 1.0, %v1722
  %v1724 = vrcp.pop %v1620
  %v1725 = vmul.f32 1.0, %v1724
  %v1726 = vrcp.pop %v1621
  %v1727 = vmul.f32 1.0, %v1726
  %v1728 = vrcp.pop %v1622
  %v1729 = vmul.f32 1.0, %v1728
  %v1730 = vrcp.pop %v1623
  %v1731 = vmul.f32 1.0, %v1730
  %v1732 = vrcp.pop %v1624
  %v1733 = vmul.f32 1.0, %v1732
  %v1734 = vrcp.pop %v1625
  %v1735 = vmul.f32 1.0, %v1734
  %v1736 = vrcp.pop %v1626
  %v1737 = vmul.f32 1.0, %v1736
  %v1738 = vrcp.pop %v1627
  %v1739 = vmul.f32 1.0, %v1738
  %v1740 = vrcp.pop %v1628
  %v1741 = vmul.f32 1.0, %v1740
  %v1742 = vrcp.pop %v1629
  %v1743 = vmul.f32 1.0, %v1742
  %v1744 = vrcp.pop %v1630
  %v1745 = vmul.f32 1.0, %v1744
  %v1746 = vrcp.pop %v1631
  %v1747 = vmul.f32 1.0, %v1746
  %v1748 = vrcp.pop %v1632
  %v1749 = vmul.f32 1.0, %v1748
  %v1750 = vrcp.pop %v1633
  %v1751 = vmul.f32 1.0, %v1750
  %v1752 = vrcp.pop %v1634
  %v1753 = vmul.f32 1.0, %v1752
  %v1754 = vrcp.pop %v1635
  %v1755 = vmul.f32 1.0, %v1754
  %v1756 = vrcp.pop %v1636
  %v1757 = vmul.f32 1.0, %v1756
  %v1758 = vrcp.pop %v1637
  %v1759 = vmul.f32 1.0, %v1758
  %v1760 = vrcp.pop %v1638
  %v1761 = vmul.f32 1.0, %v1760
  %v1762 = vrcp.pop %v1639
  %v1763 = vmul.f32 1.0, %v1762
  %v1764 = vrcp.pop %v1640
  %v1765 = vmul.f32 1.0, %v1764
  %v1766 = vrcp.pop %v1641
  %v1767 = vmul.f32 1.0, %v1766
  %v1768 = vrcp.pop %v1642
  %v1769 = vmul.f32 1.0, %v1768
  %v1770 = vrcp.pop %v1643
  %v1771 = vmul.f32 1.0, %v1770
  %1772 = vst [vmem:[%s5] sm:$0xff] %v1645
  %1773 = vst [vmem:[%s5 + $0x8] sm:$0xff] %v1647
  %1774 = vst [vmem:[%s5 + $0x10] sm:$0xff] %v1649
  %1775 = vst [vmem:[%s5 + $0x18] sm:$0xff] %v1651
  %1776 = vst [vmem:[%s5 + $0x20] sm:$0xff] %v1653
  %1777 = vst [vmem:[%s5 + $0x28] sm:$0xff] %v1655
  %1778 = vst [vmem:[%s5 + $0x30] sm:$0xff] %v1657
  %1779 = vst [vmem:[%s5 + $0x38] sm:$0xff] %v1659
  %1780 = vst [vmem:[%s5 + $0x40] sm:$0xff] %v1661
  %1781 = vst [vmem:[%s5 + $0x48] sm:$0xff] %v1663
  %1782 = vst [vmem:[%s5 + $0x50] sm:$0xff] %v1665
  %1783 = vst [vmem:[%s5 + $0x58] sm:$0xff] %v1667
  %1784 = vst [vmem:[%s5 + $0x60] sm:$0xff] %v1669
  %1785 = vst [vmem:[%s5 + $0x68] sm:$0xff] %v1671
  %1786 = vst [vmem:[%s5 + $0x70] sm:$0xff] %v1673
  %1787 = vst [vmem:[%s5 + $0x78] sm:$0xff] %v1675
  %1788 = vst [vmem:[%s5 + $0x80] sm:$0xff] %v1677
  %1789 = vst [vmem:[%s5 + $0x88] sm:$0xff] %v1679
  %1790 = vst [vmem:[%s5 + $0x90] sm:$0xff] %v1681
  %1791 = vst [vmem:[%s5 + $0x98] sm:$0xff] %v1683
  %1792 = vst [vmem:[%s5 + $0xa0] sm:$0xff] %v1685
  %1793 = vst [vmem:[%s5 + $0xa8] sm:$0xff] %v1687
  %1794 = vst [vmem:[%s5 + $0xb0] sm:$0xff] %v1689
  %1795 = vst [vmem:[%s5 + $0xb8] sm:$0xff] %v1691
  %1796 = vst [vmem:[%s5 + $0xc0] sm:$0xff] %v1693
  %1797 = vst [vmem:[%s5 + $0xc8] sm:$0xff] %v1695
  %1798 = vst [vmem:[%s5 + $0xd0] sm:$0xff] %v1697
  %1799 = vst [vmem:[%s5 + $0xd8] sm:$0xff] %v1699
  %1800 = vst [vmem:[%s5 + $0xe0] sm:$0xff] %v1701
  %1801 = vst [vmem:[%s5 + $0xe8] sm:$0xff] %v1703
  %1802 = vst [vmem:[%s5 + $0xf0] sm:$0xff] %v1705
  %1803 = vst [vmem:[%s5 + $0xf8] sm:$0xff] %v1707
  %1804 = vst [vmem:[%s5 + $0x100] sm:$0xff] %v1709
  %1805 = vst [vmem:[%s5 + $0x108] sm:$0xff] %v1711
  %1806 = vst [vmem:[%s5 + $0x110] sm:$0xff] %v1713
  %1807 = vst [vmem:[%s5 + $0x118] sm:$0xff] %v1715
  %1808 = vst [vmem:[%s5 + $0x120] sm:$0xff] %v1717
  %1809 = vst [vmem:[%s5 + $0x128] sm:$0xff] %v1719
  %1810 = vst [vmem:[%s5 + $0x130] sm:$0xff] %v1721
  %1811 = vst [vmem:[%s5 + $0x138] sm:$0xff] %v1723
  %1812 = vst [vmem:[%s5 + $0x140] sm:$0xff] %v1725
  %1813 = vst [vmem:[%s5 + $0x148] sm:$0xff] %v1727
  %1814 = vst [vmem:[%s5 + $0x150] sm:$0xff] %v1729
  %1815 = vst [vmem:[%s5 + $0x158] sm:$0xff] %v1731
  %1816 = vst [vmem:[%s5 + $0x160] sm:$0xff] %v1733
  %1817 = vst [vmem:[%s5 + $0x168] sm:$0xff] %v1735
  %1818 = vst [vmem:[%s5 + $0x170] sm:$0xff] %v1737
  %1819 = vst [vmem:[%s5 + $0x178] sm:$0xff] %v1739
  %1820 = vst [vmem:[%s5 + $0x180] sm:$0xff] %v1741
  %1821 = vst [vmem:[%s5 + $0x188] sm:$0xff] %v1743
  %1822 = vst [vmem:[%s5 + $0x190] sm:$0xff] %v1745
  %1823 = vst [vmem:[%s5 + $0x198] sm:$0xff] %v1747
  %1824 = vst [vmem:[%s5 + $0x1a0] sm:$0xff] %v1749
  %1825 = vst [vmem:[%s5 + $0x1a8] sm:$0xff] %v1751
  %1826 = vst [vmem:[%s5 + $0x1b0] sm:$0xff] %v1753
  %1827 = vst [vmem:[%s5 + $0x1b8] sm:$0xff] %v1755
  %1828 = vst [vmem:[%s5 + $0x1c0] sm:$0xff] %v1757
  %1829 = vst [vmem:[%s5 + $0x1c8] sm:$0xff] %v1759
  %1830 = vst [vmem:[%s5 + $0x1d0] sm:$0xff] %v1761
  %1831 = vst [vmem:[%s5 + $0x1d8] sm:$0xff] %v1763
  %1832 = vst [vmem:[%s5 + $0x1e0] sm:$0xff] %v1765
  %1833 = vst [vmem:[%s5 + $0x1e8] sm:$0xff] %v1767
  %1834 = vst [vmem:[%s5 + $0x1f0] sm:$0xff] %v1769
  %1835 = vst [vmem:[%s5 + $0x1f8] sm:$0xff] %v1771
  // Predicated region
  $region22: #{shallow_ffnn_forward.1} parent=0 // pred_check
    _
  $region23: #{shallow_ffnn_forward.1} parent=0 // pred_check_branch
    %1837 = sbr.rel (0) target = $region25
  $region24: #{shallow_ffnn_forward.1} parent=0 // pred_region
    _
  $region25: #{shallow_ffnn_forward.1} parent=0 // pred_fallthru
    _
  // Predicated region
  $region26: #{shallow_ffnn_forward.1} parent=0 // pred_check
    _
  $region27: #{shallow_ffnn_forward.1} parent=0 // pred_check_branch
    %1839 = sbr.rel (0) target = $region29
  $region28: #{shallow_ffnn_forward.1} parent=0 // pred_region
    _
  $region29: #{shallow_ffnn_forward.1} parent=0 // pred_fallthru
    _

</llo_original>
